<compile_context>
chip_gen: v5e
topology: v5e:2x2
jax: 0.10.0
libtpu: 0.0.40
codegen_flags: <defaults>
</compile_context>

<pallas_src>
import functools

import jax
import jax.numpy as jnp
from jax.experimental import pallas as pl
from jax.experimental.pallas import tpu as pltpu

OBS_DIM = 28
ACT_DIM = 3
HID = 256
MM_PAD = 128    # padded lane width of the folded final matmul (one MXU pass)
OUT_ROWS = 8    # sublane-dense transposed output rows (>= ACT_DIM)


# ---------------------------------------------------------------------------
# Pallas kernel:  (BN folded) Linear+tanh -> Linear+tanh -> Linear (folded),
# transposed (8, tile_n) lane-dense store.
# ---------------------------------------------------------------------------
def bc_encoder_kernel(x_ref, w1_ref, b1_ref, w2_ref, b2_ref, w34_ref, b34_ref,
                      out_ref, *, matmul_dtype, tanh_dtype):
    x = x_ref[...]                                       # (tile_n, 28), matmul_dtype

    def act(h):
        # tanh in tanh_dtype (bf16 on v6e/v7x EUP), back to MXU operand dtype.
        return jnp.tanh(h.astype(tanh_dtype)).astype(matmul_dtype)

    # Linear(28, 256) + Tanh   (BatchNorm affine pre-folded into w1/b1)
    h = act(jnp.dot(x, w1_ref[...],
                    preferred_element_type=jnp.float32) + b1_ref[...])
    # Linear(256, 256) + Tanh
    h = act(jnp.dot(h, w2_ref[...],
                    preferred_element_type=jnp.float32) + b2_ref[...])
    # Folded Linear(256,16) @ Linear(16,3), zero-padded to 128 lanes for the MXU
    out = jnp.dot(h, w34_ref[...],
                  preferred_element_type=jnp.float32) + b34_ref[...]

    # Keep the HBM writeback tiny: slice the 8 leading lanes and store the
    # transpose — (8, tile_n) f32, lane-dense along N (tile_n % 128 == 0).
    out_ref[...] = jnp.transpose(out[:, :OUT_ROWS]).astype(out_ref.dtype)


# ---------------------------------------------------------------------------
# Wrapper helpers: parameter folding, tiling, dtype selection
# ---------------------------------------------------------------------------
def _fold_params(params, matmul_dtype):
    (bn_scale, bn_bias, w1, b1, w2, b2, w3, b3, w4, b4) = params

    # Fold BN affine (eval mode) into the first Linear:
    #   (x*s + t) @ W1 + b1 == x @ (diag(s) W1) + (t @ W1 + b1)
    w1f = bn_scale.reshape(-1, 1) * w1                     # (28, 256)
    b1f = bn_bias @ w1 + b1                                # (1, 256)

    # Fold the last two (purely linear) layers: W34 = W3 @ W4
    w34 = w3 @ w4                                          # (256, 3)
    b34 = b3 @ w4 + b4                                     # (1, 3)

    # Pad the folded output 3 -> 128 lanes with zeros (one MXU column pass).
    w34p = jnp.zeros((w34.shape[0], MM_PAD), jnp.float32).at[:, :ACT_DIM].set(w34)
    b34p = jnp.zeros((1, MM_PAD), jnp.float32).at[:, :ACT_DIM].set(b34)

    return (w1f.astype(matmul_dtype), b1f.astype(jnp.float32),
            w2.astype(matmul_dtype), b2.astype(jnp.float32),
            w34p.astype(matmul_dtype), b34p.astype(jnp.float32))


def _round_up(x, m):
    return ((x + m - 1) // m) * m


def _default_tanh_dtype(matmul_dtype):
    if matmul_dtype != jnp.bfloat16:
        return jnp.float32
    try:
        kind = jax.devices()[0].device_kind.lower()
    except Exception:
        return jnp.float32
    # bf16 EUP (tanh) exists on v6e / v7x; keep f32 tanh on v5e and older.
    return jnp.bfloat16 if ("v6" in kind or "v7" in kind) else jnp.float32


# ---------------------------------------------------------------------------
# Wrapper: padding + pallas_call
# ---------------------------------------------------------------------------
def bc_encoder(x, params, *, tile_n=None, matmul_dtype=jnp.bfloat16,
               tanh_dtype=None):
    """x: (N, 28) float32 -> (N, 3) float32."""
    N, obs_dim = x.shape
    assert obs_dim == OBS_DIM

    if tanh_dtype is None:
        tanh_dtype = _default_tanh_dtype(matmul_dtype)

    # Adaptive tile: large tiles amortize the ~0.35us per-grid-step overhead,
    # small batches don't blow up to a full 2048-row tile, moderate N gets
    # >= 2 parallel steps (v7x megacore).  Cap 2048 keeps VMEM (~10 MiB incl.
    # f32 intermediates) well under the v7x 64 MiB / 32 MiB-scoped limit.
    if tile_n is None:
        tile_n = min(2048, max(256, _round_up(pl.cdiv(N, 2), 256)))
    assert tile_n % 256 == 0, "tile_n must be a multiple of 256"

    n_pad = _round_up(N, tile_n)
    x = x.astype(matmul_dtype)               # halve the x HBM read when bf16
    if n_pad != N:
        x = jnp.pad(x, ((0, n_pad - N), (0, 0)))

    w1, b1, w2, b2, w34, b34 = _fold_params(params, matmul_dtype)

    full = lambda i: (0, 0)                  # parameters are resident, un-tiled
    grid = (n_pad // tile_n,)

    kernel = functools.partial(bc_encoder_kernel, matmul_dtype=matmul_dtype,
                               tanh_dtype=tanh_dtype)

    # Advisory cost estimate so XLA schedules surrounding ops sensibly.
    itemsize = jnp.dtype(matmul_dtype).itemsize
    weight_elems = OBS_DIM * HID + HID * HID + HID * MM_PAD
    flops = 2 * n_pad * weight_elems
    transcendentals = 2 * HID * n_pad
    bytes_accessed = (n_pad * OBS_DIM * itemsize            # x read
                      + OUT_ROWS * n_pad * 4                # transposed out write
                      + weight_elems * itemsize             # weights
                      + (HID + HID + MM_PAD) * 4)           # biases

    out_t = pl.pallas_call(
        kernel,
        out_shape=jax.ShapeDtypeStruct((OUT_ROWS, n_pad), jnp.float32),
        grid_spec=pltpu.PrefetchScalarGridSpec(
            num_scalar_prefetch=0,
            grid=grid,
            in_specs=[
                pl.BlockSpec((tile_n, OBS_DIM), lambda i: (i, 0)),   # x tiles
                pl.BlockSpec(w1.shape, full), pl.BlockSpec(b1.shape, full),
                pl.BlockSpec(w2.shape, full), pl.BlockSpec(b2.shape, full),
                pl.BlockSpec(w34.shape, full), pl.BlockSpec(b34.shape, full),
            ],
            out_specs=pl.BlockSpec((OUT_ROWS, tile_n), lambda i: (0, i)),
        ),
        compiler_params=pltpu.CompilerParams(
            dimension_semantics=("parallel",)),
        cost_estimate=pl.CostEstimate(
            flops=flops, transcendentals=transcendentals,
            bytes_accessed=bytes_accessed),
    )(x, w1, b1, w2, b2, w34, b34)

    # Tiny slice of the (8, n_pad) transposed buffer, back to (N, 3).
    return out_t[:ACT_DIM, :N].T


# ---------------------------------------------------------------------------
# Deterministic parameter init (shapes from BC.__init__)
# ---------------------------------------------------------------------------
def init_params(key, obs_dim=OBS_DIM):
    ks = jax.random.split(key, 10)

    def lin(k, fin, fout):
        kw, kb = jax.random.split(k)
        bound = 1.0 / jnp.sqrt(fin)
        w = jax.random.uniform(kw, (fin, fout), jnp.float32, -bound, bound)
        b = jax.random.uniform(kb, (1, fout), jnp.float32, -bound, bound)
        return w, b

    # BatchNorm1d(28): gamma, beta, running_mean, running_var (eval mode)
    gamma = 1.0 + 0.1 * jax.random.normal(ks[0], (obs_dim,), jnp.float32)
    beta = 0.1 * jax.random.normal(ks[1], (obs_dim,), jnp.float32)
    rmean = 0.1 * jax.random.normal(ks[2], (obs_dim,), jnp.float32)
    rvar = jnp.abs(1.0 + 0.1 * jax.random.normal(ks[3], (obs_dim,), jnp.float32))
    eps = 1e-5
    bn_scale = (gamma / jnp.sqrt(rvar + eps)).reshape(1, obs_dim)
    bn_bias = (beta - rmean * gamma / jnp.sqrt(rvar + eps)).reshape(1, obs_dim)

    w1, b1 = lin(ks[4], obs_dim, 256)
    w2, b2 = lin(ks[5], 256, 256)
    w3, b3 = lin(ks[6], 256, 16)
    w4, b4 = lin(ks[7], 16, 3)
    return (bn_scale, bn_bias, w1, b1, w2, b2, w3, b3, w4, b4)


# ---------------------------------------------------------------------------
# BC.forward equivalent (glue in plain JAX, hot path in the Pallas kernel)
# ---------------------------------------------------------------------------
def bc_forward(input_data, params):
    whole_seq = input_data['img']                       # (B, S, 28)
    _ = input_data['act'][:, :, :-1]                    # sliced, unused downstream
    batch_size, seq_len, obs_dim = whole_seq.shape

    x_flat = whole_seq.reshape(-1, obs_dim)             # .view(-1, obs_dim)
    action = bc_encoder(x_flat, params)                 # (B*S, 3)

    return {
        'latent_action_t_mean': action,
        'latent_action_t_scale': jnp.ones_like(action),
        'next_pos_posterior_mean': action,
        'goal_switching_posterior_probs': None,
        'goal_onehot_idx': None,
        'goal_idx_seq': jnp.ones((batch_size, seq_len, 1), jnp.float32),
        'goal_seq': None,
        'states_prior_mean': action,
        'image_dist_mean': action,
        'goal_switching_prior': None,
        'goal_posterior': None,
        'goal_prior': None,
    }


# ---------------------------------------------------------------------------
# Pure-JAX reference of the (unfolded) encoder for correctness checks
# ---------------------------------------------------------------------------
def _reference_encoder(x, params):
    (bn_s, bn_b, w1, b1, w2, b2, w3, b3, w4, b4) = params
    h = x * bn_s + bn_b
    h = jnp.tanh(h @ w1 + b1)
    h = jnp.tanh(h @ w2 + b2)
    h = h @ w3 + b3
    return h @ w4 + b4


if __name__ == "__main__":
    key = jax.random.PRNGKey(0)
    k_params, k_img, k_act, k_big = jax.random.split(key, 4)

    batch, seq, obs_dim, act_dim = 2, 8, OBS_DIM, ACT_DIM
    params = init_params(k_params, obs_dim)

    input_data = {
        'img': jax.random.normal(k_img, (batch, seq, obs_dim), jnp.float32),
        'act': jax.random.normal(k_act, (batch, seq, act_dim + 1), jnp.float32),
    }

    out = bc_forward(input_data, params)
    action = jax.block_until_ready(out['latent_action_t_mean'])

    xf = input_data['img'].reshape(-1, obs_dim)
    ref = _reference_encoder(xf, params)
    assert action.shape == (batch * seq, act_dim)
    # Default path uses bf16 MXU operands (+ bf16 tanh on v6e/v7x).
    assert jnp.allclose(action, ref, atol=5e-2, rtol=5e-2)

    # f32 matmul path: tight structural check of the folds / transposed store.
    action_f32 = jax.block_until_ready(
        bc_encoder(xf, params, matmul_dtype=jnp.float32))
    assert jnp.allclose(action_f32, ref, atol=2e-3, rtol=2e-3)

    # Larger, non-multiple-of-tile N exercising a >=2-step grid plus padding.
    n_big = 300
    x_big = jax.random.normal(k_big, (n_big, obs_dim), jnp.float32)
    ref_big = _reference_encoder(x_big, params)
    act_big = jax.block_until_ready(
        bc_encoder(x_big, params, matmul_dtype=jnp.float32))
    assert act_big.shape == (n_big, act_dim)
    assert jnp.allclose(act_big, ref_big, atol=2e-3, rtol=2e-3)

    print("KERNEL_OK")
</pallas_src>

<mosaic_0001>
module attributes {stable_mosaic.version = 11 : i64} {
  func.func @bc_encoder_kernel(%arg0: i32, %arg1: memref<256x28xbf16, #tpu.memory_space<vmem>>, %arg2: memref<28x256xbf16, #tpu.memory_space<vmem>>, %arg3: memref<1x256xf32, #tpu.memory_space<vmem>>, %arg4: memref<256x256xbf16, #tpu.memory_space<vmem>>, %arg5: memref<1x256xf32, #tpu.memory_space<vmem>>, %arg6: memref<256x128xbf16, #tpu.memory_space<vmem>>, %arg7: memref<1x128xf32, #tpu.memory_space<vmem>>, %arg8: memref<8x256xf32, #tpu.memory_space<vmem>>) attributes {dimension_semantics = [#tpu.dimension_semantics<parallel>], iteration_bounds = array<i64: 1>, scalar_prefetch = 0 : i64, scratch_operands = 0 : i64, tpu.core_type = #tpu.core_type<tc>, window_params = [{transform_indices = @transform_0, window_bounds = array<i64: 256, 28>}, {pipeline_mode = #tpu.pipeline_mode<synchronous>, transform_indices = @transform_1, window_bounds = array<i64: 28, 256>}, {pipeline_mode = #tpu.pipeline_mode<synchronous>, transform_indices = @transform_2, window_bounds = array<i64: 1, 256>}, {pipeline_mode = #tpu.pipeline_mode<synchronous>, transform_indices = @transform_3, window_bounds = array<i64: 256, 256>}, {pipeline_mode = #tpu.pipeline_mode<synchronous>, transform_indices = @transform_4, window_bounds = array<i64: 1, 256>}, {pipeline_mode = #tpu.pipeline_mode<synchronous>, transform_indices = @transform_5, window_bounds = array<i64: 256, 128>}, {pipeline_mode = #tpu.pipeline_mode<synchronous>, transform_indices = @transform_6, window_bounds = array<i64: 1, 128>}, {transform_indices = @transform_7, window_bounds = array<i64: 8, 256>}]} {
    %c0 = arith.constant 0 : index
    %c0_0 = arith.constant 0 : index
    %0 = vector.load %arg1[%c0, %c0_0] : memref<256x28xbf16, #tpu.memory_space<vmem>>, vector<256x28xbf16>
    %c0_1 = arith.constant 0 : index
    %c0_2 = arith.constant 0 : index
    %1 = vector.load %arg2[%c0_1, %c0_2] : memref<28x256xbf16, #tpu.memory_space<vmem>>, vector<28x256xbf16>
    %cst = arith.constant dense<0.000000e+00> : vector<256x256xf32>
    %2 = tpu.matmul %0, %1, %cst {dimension_numbers = #tpu.dot_dimension_numbers<[1], [0], [0], [1], [0, 0, 1, 1], [], []>} : vector<256x28xbf16>, vector<28x256xbf16>, vector<256x256xf32> -> vector<256x256xf32>
    %c0_3 = arith.constant 0 : index
    %c0_4 = arith.constant 0 : index
    %3 = vector.load %arg3[%c0_3, %c0_4] : memref<1x256xf32, #tpu.memory_space<vmem>>, vector<1x256xf32>
    %4 = vector.broadcast %3 : vector<1x256xf32> to vector<256x256xf32>
    %5 = arith.addf %2, %4 : vector<256x256xf32>
    %6 = math.tanh %5 : vector<256x256xf32>
    %7 = arith.truncf %6 : vector<256x256xf32> to vector<256x256xbf16>
    %c0_5 = arith.constant 0 : index
    %c0_6 = arith.constant 0 : index
    %8 = vector.load %arg4[%c0_5, %c0_6] : memref<256x256xbf16, #tpu.memory_space<vmem>>, vector<256x256xbf16>
    %cst_7 = arith.constant dense<0.000000e+00> : vector<256x256xf32>
    %9 = tpu.matmul %7, %8, %cst_7 {dimension_numbers = #tpu.dot_dimension_numbers<[1], [0], [0], [1], [0, 0, 1, 1], [], []>} : vector<256x256xbf16>, vector<256x256xbf16>, vector<256x256xf32> -> vector<256x256xf32>
    %c0_8 = arith.constant 0 : index
    %c0_9 = arith.constant 0 : index
    %10 = vector.load %arg5[%c0_8, %c0_9] : memref<1x256xf32, #tpu.memory_space<vmem>>, vector<1x256xf32>
    %11 = vector.broadcast %10 : vector<1x256xf32> to vector<256x256xf32>
    %12 = arith.addf %9, %11 : vector<256x256xf32>
    %13 = math.tanh %12 : vector<256x256xf32>
    %14 = arith.truncf %13 : vector<256x256xf32> to vector<256x256xbf16>
    %c0_10 = arith.constant 0 : index
    %c0_11 = arith.constant 0 : index
    %15 = vector.load %arg6[%c0_10, %c0_11] : memref<256x128xbf16, #tpu.memory_space<vmem>>, vector<256x128xbf16>
    %cst_12 = arith.constant dense<0.000000e+00> : vector<256x128xf32>
    %16 = tpu.matmul %14, %15, %cst_12 {dimension_numbers = #tpu.dot_dimension_numbers<[1], [0], [0], [1], [0, 0, 1, 1], [], []>} : vector<256x256xbf16>, vector<256x128xbf16>, vector<256x128xf32> -> vector<256x128xf32>
    %c0_13 = arith.constant 0 : index
    %c0_14 = arith.constant 0 : index
    %17 = vector.load %arg7[%c0_13, %c0_14] : memref<1x128xf32, #tpu.memory_space<vmem>>, vector<1x128xf32>
    %18 = vector.broadcast %17 : vector<1x128xf32> to vector<256x128xf32>
    %19 = arith.addf %16, %18 : vector<256x128xf32>
    %20 = vector.extract_strided_slice %19 {offsets = [0, 0], sizes = [256, 8], strides = [1, 1]} : vector<256x128xf32> to vector<256x8xf32>
    %21 = tpu.transpose %20, [1, 0] : vector<256x8xf32> -> vector<8x256xf32>
    %c0_15 = arith.constant 0 : index
    %c0_16 = arith.constant 0 : index
    %22 = vector.load %arg8[%c0_15, %c0_16] : memref<8x256xf32, #tpu.memory_space<vmem>>, vector<8x256xf32>
    tpu.vector_store %arg8[%c0_15, %c0_16], %21 {strides = array<i32>} : memref<8x256xf32, #tpu.memory_space<vmem>>, vector<8x256xf32>,
    return
  }
  func.func @transform_0(%arg0: i32) -> (i32, i32) {
    %c0_i32 = arith.constant 0 : i32
    %c0_i32_0 = arith.constant 0 : i32
    return %arg0, %c0_i32 : i32, i32
  }
  func.func @transform_1(%arg0: i32) -> (i32, i32) {
    %c0_i32 = arith.constant 0 : i32
    %c0_i32_0 = arith.constant 0 : i32
    %c0_i32_1 = arith.constant 0 : i32
    return %c0_i32, %c0_i32_0 : i32, i32
  }
  func.func @transform_2(%arg0: i32) -> (i32, i32) {
    %c0_i32 = arith.constant 0 : i32
    %c0_i32_0 = arith.constant 0 : i32
    %c0_i32_1 = arith.constant 0 : i32
    return %c0_i32, %c0_i32_0 : i32, i32
  }
  func.func @transform_3(%arg0: i32) -> (i32, i32) {
    %c0_i32 = arith.constant 0 : i32
    %c0_i32_0 = arith.constant 0 : i32
    %c0_i32_1 = arith.constant 0 : i32
    return %c0_i32, %c0_i32_0 : i32, i32
  }
  func.func @transform_4(%arg0: i32) -> (i32, i32) {
    %c0_i32 = arith.constant 0 : i32
    %c0_i32_0 = arith.constant 0 : i32
    %c0_i32_1 = arith.constant 0 : i32
    return %c0_i32, %c0_i32_0 : i32, i32
  }
  func.func @transform_5(%arg0: i32) -> (i32, i32) {
    %c0_i32 = arith.constant 0 : i32
    %c0_i32_0 = arith.constant 0 : i32
    %c0_i32_1 = arith.constant 0 : i32
    return %c0_i32, %c0_i32_0 : i32, i32
  }
  func.func @transform_6(%arg0: i32) -> (i32, i32) {
    %c0_i32 = arith.constant 0 : i32
    %c0_i32_0 = arith.constant 0 : i32
    %c0_i32_1 = arith.constant 0 : i32
    return %c0_i32, %c0_i32_0 : i32, i32
  }
  func.func @transform_7(%arg0: i32) -> (i32, i32) {
    %c0_i32 = arith.constant 0 : i32
    %c0_i32_0 = arith.constant 0 : i32
    return %c0_i32, %arg0 : i32, i32
  }
}

</mosaic_0001>

<llo_original>
// kernel: tpu_custom_call.1
$region0: #{tpu_custom_call.1}
  #allocation0 [shape = 'u32[]', space=smem, size = 0x4, offset = 0x4, fixed_abs, tag = 'smem constant byte address 0x4 - core index']
  #allocation1 [shape = 'u32[72,128]{1,0:T(1,128)}', space=vmem, size = 0x9000, scoped, tag = 'internal scratch']
  %s0 = inlined_call_operand.vmem [shape: bf16[256,28], index: 0, kind: input, shape index: {}]
  %s1 = inlined_call_operand.vmem [shape: bf16[28,256], index: 1, kind: input, shape index: {}]
  %s2 = inlined_call_operand.vmem [shape: f32[1,256], index: 2, kind: input, shape index: {}]
  %s3 = inlined_call_operand.hbm [shape: bf16[256,256], index: 3, kind: input, shape index: {}]
  %s4 = inlined_call_operand.vmem [shape: f32[1,256], index: 4, kind: input, shape index: {}]
  %s5 = inlined_call_operand.vmem [shape: bf16[256,128], index: 5, kind: input, shape index: {}]
  %s6 = inlined_call_operand.vmem [shape: f32[1,128], index: 6, kind: input, shape index: {}]
  %s7 = inlined_call_operand.hbm [shape: f32[8,256], index: 7, kind: output, shape index: {}]
  %s8 = sld [smem:[#allocation0]]
  $region42: #{tpu_custom_call.1} parent=0
    _
  %s10 = ssub.s32 1, %s8
  %s11 = scalar_select 0, %s10, %s8
  $region1: #{tpu_custom_call.1} parent=0
    #allocation2 [shape = 'u8[131072]{0}', space=vmem, size = 0x20000, scoped, tag = 'input window, operand 3, single buffered']
    #allocation3 [shape = 's32[1]{0}', space=sflag, size = 0x4, scoped, tag = 'scoped memory for tpu_custom_call.1']
    #allocation4 [shape = 's32[1]{0}', space=sflag, size = 0x4, scoped, tag = 'scoped memory for tpu_custom_call.1']
    #allocation5 [shape = 'u8[8192]{0}', space=vmem, size = 0x2000, scoped, tag = 'output window, operand 0, single buffered']
    %12 = vsyncpa [#allocation3], 0
    %13 = vsyncpa [#allocation4], 0
    // Predicated region
    $region2: #{tpu_custom_call.1} parent=1 // pred_check
      _
    $region3: #{tpu_custom_call.1} parent=1 // pred_check_branch
      %15 = sbr.rel (0) target = $region5
    $region4: #{tpu_custom_call.1} parent=1 // pred_region
      _
    $region5: #{tpu_custom_call.1} parent=1 // pred_fallthru
      _
    // Predicated region
    $region6: #{tpu_custom_call.1} parent=1 // pred_check
      _
    $region7: #{tpu_custom_call.1} parent=1 // pred_check_branch
      %17 = sbr.rel (0) target = $region9
    $region8: #{tpu_custom_call.1} parent=1 // pred_region
      _
    $region9: #{tpu_custom_call.1} parent=1 // pred_fallthru
      _
    // Predicated region
    $region10: #{tpu_custom_call.1} parent=1 // pred_check
      _
    $region11: #{tpu_custom_call.1} parent=1 // pred_check_branch
      %19 = sbr.rel (0) target = $region13
    $region12: #{tpu_custom_call.1} parent=1 // pred_region
      _
    $region13: #{tpu_custom_call.1} parent=1 // pred_fallthru
      _
    // Predicated region
    $region14: #{tpu_custom_call.1} parent=1 // pred_check
      _
    $region15: #{tpu_custom_call.1} parent=1 // pred_check_branch
      %21 = sbr.rel (0) target = $region17
    $region16: #{tpu_custom_call.1} parent=1 // pred_region
      %23 = vsyncadd [#allocation3], 0
      %s24 = sshll.u32 %s3, 4
      %s25 = int_to_ptr.hbm [resolvable:$true] %s24
      %s26 = sshll.u32 [#allocation2], 4
      %s27 = int_to_ptr.vmem [resolvable:$true] %s26
      %32 = dma.hbm_to_vmem [thread:$0]  %s25, 4096, %s27, [#allocation3], 128, 128, 8
    $region17: #{tpu_custom_call.1} parent=1 // pred_fallthru
      _
    // Predicated region
    $region18: #{tpu_custom_call.1} parent=1 // pred_check
      _
    $region19: #{tpu_custom_call.1} parent=1 // pred_check_branch
      %34 = sbr.rel (0) target = $region21
    $region20: #{tpu_custom_call.1} parent=1 // pred_region
      _
    $region21: #{tpu_custom_call.1} parent=1 // pred_fallthru
      _
    // Predicated region
    $region22: #{tpu_custom_call.1} parent=1 // pred_check
      _
    $region23: #{tpu_custom_call.1} parent=1 // pred_check_branch
      %36 = sbr.rel (0) target = $region25
    $region24: #{tpu_custom_call.1} parent=1 // pred_region
      _
    $region25: #{tpu_custom_call.1} parent=1 // pred_fallthru
      _
    // Predicated region
    $region26: #{tpu_custom_call.1} parent=1 // pred_check
      _
    $region27: #{tpu_custom_call.1} parent=1 // pred_check_branch
      %38 = sbr.rel (0) target = $region29
    $region28: #{tpu_custom_call.1} parent=1 // pred_region
      _
    $region29: #{tpu_custom_call.1} parent=1 // pred_fallthru
      _
    // Predicated region
    $region30: #{tpu_custom_call.1} parent=1 // pred_check
      _
    $region31: #{tpu_custom_call.1} parent=1 // pred_check_branch
      %40 = sbr.rel (0) target = $region33
    $region32: #{tpu_custom_call.1} parent=1 // pred_region
      %42 = dma.done [#allocation3], 4096
    $region33: #{tpu_custom_call.1} parent=1 // pred_fallthru
      _
    %v44 = vld [vmem:[%s0] sm:$0xf]
    %v45 = vld [vmem:[%s0 + $0x4] sm:$0xf]
    %v46 = vld [vmem:[%s0 + $0x8] sm:$0xf]
    %v47 = vld [vmem:[%s0 + $0xc] sm:$0xf]
    %v48 = vld [vmem:[%s0 + $0x10] sm:$0xf]
    %v49 = vld [vmem:[%s0 + $0x14] sm:$0xf]
    %v50 = vld [vmem:[%s0 + $0x18] sm:$0xf]
    %v51 = vld [vmem:[%s0 + $0x1c] sm:$0xf]
    %v52 = vld [vmem:[%s0 + $0x20] sm:$0xf]
    %v53 = vld [vmem:[%s0 + $0x24] sm:$0xf]
    %v54 = vld [vmem:[%s0 + $0x28] sm:$0xf]
    %v55 = vld [vmem:[%s0 + $0x2c] sm:$0xf]
    %v56 = vld [vmem:[%s0 + $0x30] sm:$0xf]
    %v57 = vld [vmem:[%s0 + $0x34] sm:$0xf]
    %v58 = vld [vmem:[%s0 + $0x38] sm:$0xf]
    %v59 = vld [vmem:[%s0 + $0x3c] sm:$0xf]
    %v60 = vld [vmem:[%s0 + $0x40] sm:$0xf]
    %v61 = vld [vmem:[%s0 + $0x44] sm:$0xf]
    %v62 = vld [vmem:[%s0 + $0x48] sm:$0xf]
    %v63 = vld [vmem:[%s0 + $0x4c] sm:$0xf]
    %v64 = vld [vmem:[%s0 + $0x50] sm:$0xf]
    %v65 = vld [vmem:[%s0 + $0x54] sm:$0xf]
    %v66 = vld [vmem:[%s0 + $0x58] sm:$0xf]
    %v67 = vld [vmem:[%s0 + $0x5c] sm:$0xf]
    %v68 = vld [vmem:[%s0 + $0x60] sm:$0xf]
    %v69 = vld [vmem:[%s0 + $0x64] sm:$0xf]
    %v70 = vld [vmem:[%s0 + $0x68] sm:$0xf]
    %v71 = vld [vmem:[%s0 + $0x6c] sm:$0xf]
    %v72 = vld [vmem:[%s0 + $0x70] sm:$0xf]
    %v73 = vld [vmem:[%s0 + $0x74] sm:$0xf]
    %v74 = vld [vmem:[%s0 + $0x78] sm:$0xf]
    %v75 = vld [vmem:[%s0 + $0x7c] sm:$0xf]
    %v76 = vld [vmem:[%s1] sm:$0xff]
    %v77 = vld [vmem:[%s1 + $0x8] sm:$0xff]
    %v78 = vld [vmem:[%s1 + $0x10] sm:$0xff]
    %v79 = vld [vmem:[%s1 + $0x18] sm:$0x33]
    %v80 = vld [vmem:[%s2] sm:$0x3]
    %v82 = vperm.slane %v80, 0
    %v83 = vperm.slane %v80, 1
    %v118 = vunpack.c.l.b16 %v44
    %v119 = vunpack.c.l.b16 %v45
    %v120 = vunpack.c.l.b16 %v46
    %v121 = vunpack.c.l.b16 %v47
    %v122 = vunpack.c.l.b16 %v48
    %v123 = vunpack.c.l.b16 %v49
    %v124 = vunpack.c.l.b16 %v50
    %v125 = vunpack.c.l.b16 %v51
    %v126 = vunpack.c.l.b16 %v52
    %v127 = vunpack.c.l.b16 %v53
    %v128 = vunpack.c.l.b16 %v54
    %v129 = vunpack.c.l.b16 %v55
    %v130 = vunpack.c.l.b16 %v56
    %v131 = vunpack.c.l.b16 %v57
    %v132 = vunpack.c.l.b16 %v58
    %v133 = vunpack.c.l.b16 %v59
    %v134 = vunpack.c.l.b16 %v60
    %v135 = vunpack.c.l.b16 %v61
    %v136 = vunpack.c.l.b16 %v62
    %v137 = vunpack.c.l.b16 %v63
    %v138 = vunpack.c.l.b16 %v64
    %v139 = vunpack.c.l.b16 %v65
    %v140 = vunpack.c.l.b16 %v66
    %v141 = vunpack.c.l.b16 %v67
    %v142 = vunpack.c.l.b16 %v68
    %v143 = vunpack.c.l.b16 %v69
    %v144 = vunpack.c.l.b16 %v70
    %v145 = vunpack.c.l.b16 %v71
    %v146 = vunpack.c.l.b16 %v72
    %v147 = vunpack.c.l.b16 %v73
    %v148 = vunpack.c.l.b16 %v74
    %v149 = vunpack.c.l.b16 %v75
    %v150 = vpack.c.b16 %v119, %v118
    %v151 = vpack.c.b16 %v121, %v120
    %v152 = vpack.c.b16 %v123, %v122
    %v153 = vpack.c.b16 %v125, %v124
    %v154 = vpack.c.b16 %v127, %v126
    %v155 = vpack.c.b16 %v129, %v128
    %v156 = vpack.c.b16 %v131, %v130
    %v157 = vpack.c.b16 %v133, %v132
    %v158 = vpack.c.b16 %v135, %v134
    %v159 = vpack.c.b16 %v137, %v136
    %v160 = vpack.c.b16 %v139, %v138
    %v161 = vpack.c.b16 %v141, %v140
    %v162 = vpack.c.b16 %v143, %v142
    %v163 = vpack.c.b16 %v145, %v144
    %v164 = vpack.c.b16 %v147, %v146
    %v165 = vpack.c.b16 %v149, %v148
    %v170 = vunpack.c.l.b16 %v76
    %v171 = vunpack.c.h.b16 %v76
    %v172 = vunpack.c.l.b16 %v77
    %v173 = vunpack.c.h.b16 %v77
    %v174 = vunpack.c.l.b16 %v78
    %v175 = vunpack.c.h.b16 %v78
    %v176 = vunpack.c.l.b16 %v79
    %v177 = vunpack.c.h.b16 %v79
    %v178 = vpack.c.b16 %v172, %v170
    %v179 = vpack.c.b16 %v173, %v171
    %v180 = vpack.c.b16 %v176, %v174
    %v181 = vpack.c.b16 %v177, %v175
    %vm184 = vcmask 228352
    %v186 = vsel %vm184, %v150, 0
    %v189 = vsel %vm184, %v151, 0
    %v192 = vsel %vm184, %v152, 0
    %v195 = vsel %vm184, %v153, 0
    %v198 = vsel %vm184, %v154, 0
    %v201 = vsel %vm184, %v155, 0
    %v204 = vsel %vm184, %v156, 0
    %v207 = vsel %vm184, %v157, 0
    %v210 = vsel %vm184, %v158, 0
    %v213 = vsel %vm184, %v159, 0
    %v216 = vsel %vm184, %v160, 0
    %v219 = vsel %vm184, %v161, 0
    %v222 = vsel %vm184, %v162, 0
    %v225 = vsel %vm184, %v163, 0
    %v228 = vsel %vm184, %v164, 0
    %v231 = vsel %vm184, %v165, 0
    %vm233 = vcmask 1045504
    %v235 = vsel %vm233, %v180, 0
    %v238 = vsel %vm233, %v181, 0
    %240 = vmatpush.bf16.msra.mxu0 0
    %241 = vmatpush.bf16.msra.mxu0 0
    %242 = vmatpush.bf16.msra.mxu0 0
    %243 = vmatpush.bf16.msra.mxu0 0
    %244 = vmatpush.bf16.msra.mxu0 0
    %245 = vmatpush.bf16.msra.mxu0 0
    %246 = vmatpush.bf16.msra.mxu0 %v235
    %247 = vmatpush.bf16.msra.mxu0 %v178
    %248 = vmatmul.bf16.gmra.mxu0 %v186
    %v249 = vpop.f32.mrf.mxu0
    %v250 = vadd.f32 %v82, %v249
    %v251 = vpop.f32.mrf.mxu0
    %v252 = vadd.f32 %v82, %v251
    %253 = vmatmul.bf16.gmra.mxu0 %v189
    %v254 = vpop.f32.mrf.mxu0
    %v255 = vadd.f32 %v82, %v254
    %v256 = vpop.f32.mrf.mxu0
    %v257 = vadd.f32 %v82, %v256
    %258 = vmatmul.bf16.gmra.mxu0 %v192
    %v259 = vpop.f32.mrf.mxu0
    %v260 = vadd.f32 %v82, %v259
    %v261 = vpop.f32.mrf.mxu0
    %v262 = vadd.f32 %v82, %v261
    %263 = vmatmul.bf16.gmra.mxu0 %v195
    %v264 = vpop.f32.mrf.mxu0
    %v265 = vadd.f32 %v82, %v264
    %v266 = vpop.f32.mrf.mxu0
    %v267 = vadd.f32 %v82, %v266
    %268 = vmatmul.bf16.gmra.mxu0 %v198
    %v269 = vpop.f32.mrf.mxu0
    %v270 = vadd.f32 %v82, %v269
    %v271 = vpop.f32.mrf.mxu0
    %v272 = vadd.f32 %v82, %v271
    %273 = vmatmul.bf16.gmra.mxu0 %v201
    %v274 = vpop.f32.mrf.mxu0
    %v275 = vadd.f32 %v82, %v274
    %v276 = vpop.f32.mrf.mxu0
    %v277 = vadd.f32 %v82, %v276
    %278 = vmatmul.bf16.gmra.mxu0 %v204
    %v279 = vpop.f32.mrf.mxu0
    %v280 = vadd.f32 %v82, %v279
    %v281 = vpop.f32.mrf.mxu0
    %v282 = vadd.f32 %v82, %v281
    %283 = vmatmul.bf16.gmra.mxu0 %v207
    %v284 = vpop.f32.mrf.mxu0
    %v285 = vadd.f32 %v82, %v284
    %v286 = vpop.f32.mrf.mxu0
    %v287 = vadd.f32 %v82, %v286
    %288 = vmatmul.bf16.gmra.mxu0 %v210
    %v289 = vpop.f32.mrf.mxu0
    %v290 = vadd.f32 %v82, %v289
    %v291 = vpop.f32.mrf.mxu0
    %v292 = vadd.f32 %v82, %v291
    %293 = vmatmul.bf16.gmra.mxu0 %v213
    %v294 = vpop.f32.mrf.mxu0
    %v295 = vadd.f32 %v82, %v294
    %v296 = vpop.f32.mrf.mxu0
    %v297 = vadd.f32 %v82, %v296
    %298 = vmatmul.bf16.gmra.mxu0 %v216
    %v299 = vpop.f32.mrf.mxu0
    %v300 = vadd.f32 %v82, %v299
    %v301 = vpop.f32.mrf.mxu0
    %v302 = vadd.f32 %v82, %v301
    %303 = vmatmul.bf16.gmra.mxu0 %v219
    %v304 = vpop.f32.mrf.mxu0
    %v305 = vadd.f32 %v82, %v304
    %v306 = vpop.f32.mrf.mxu0
    %v307 = vadd.f32 %v82, %v306
    %308 = vmatmul.bf16.gmra.mxu0 %v222
    %v309 = vpop.f32.mrf.mxu0
    %v310 = vadd.f32 %v82, %v309
    %v311 = vpop.f32.mrf.mxu0
    %v312 = vadd.f32 %v82, %v311
    %313 = vmatmul.bf16.gmra.mxu0 %v225
    %v314 = vpop.f32.mrf.mxu0
    %v315 = vadd.f32 %v82, %v314
    %v316 = vpop.f32.mrf.mxu0
    %v317 = vadd.f32 %v82, %v316
    %318 = vmatmul.bf16.gmra.mxu0 %v228
    %v319 = vpop.f32.mrf.mxu0
    %v320 = vadd.f32 %v82, %v319
    %v321 = vpop.f32.mrf.mxu0
    %v322 = vadd.f32 %v82, %v321
    %323 = vmatmul.bf16.gmra.mxu0 %v231
    %v324 = vpop.f32.mrf.mxu0
    %v325 = vadd.f32 %v82, %v324
    %v326 = vpop.f32.mrf.mxu0
    %v327 = vadd.f32 %v82, %v326
    %328 = vdwg.mxu0
    %329 = vmatpush.bf16.msra.mxu0 0
    %330 = vmatpush.bf16.msra.mxu0 0
    %331 = vmatpush.bf16.msra.mxu0 0
    %332 = vmatpush.bf16.msra.mxu0 0
    %333 = vmatpush.bf16.msra.mxu0 0
    %334 = vmatpush.bf16.msra.mxu0 0
    %335 = vmatpush.bf16.msra.mxu0 %v238
    %336 = vmatpush.bf16.msra.mxu0 %v179
    %337 = vmatmul.bf16.gmra.mxu0 %v186
    %v338 = vpop.f32.mrf.mxu0
    %v339 = vadd.f32 %v83, %v338
    %v340 = vpop.f32.mrf.mxu0
    %v341 = vadd.f32 %v83, %v340
    %342 = vmatmul.bf16.gmra.mxu0 %v189
    %v343 = vpop.f32.mrf.mxu0
    %v344 = vadd.f32 %v83, %v343
    %v345 = vpop.f32.mrf.mxu0
    %v346 = vadd.f32 %v83, %v345
    %347 = vmatmul.bf16.gmra.mxu0 %v192
    %v348 = vpop.f32.mrf.mxu0
    %v349 = vadd.f32 %v83, %v348
    %v350 = vpop.f32.mrf.mxu0
    %v351 = vadd.f32 %v83, %v350
    %352 = vmatmul.bf16.gmra.mxu0 %v195
    %v353 = vpop.f32.mrf.mxu0
    %v354 = vadd.f32 %v83, %v353
    %v355 = vpop.f32.mrf.mxu0
    %v356 = vadd.f32 %v83, %v355
    %357 = vmatmul.bf16.gmra.mxu0 %v198
    %v358 = vpop.f32.mrf.mxu0
    %v359 = vadd.f32 %v83, %v358
    %v360 = vpop.f32.mrf.mxu0
    %v361 = vadd.f32 %v83, %v360
    %362 = vmatmul.bf16.gmra.mxu0 %v201
    %v363 = vpop.f32.mrf.mxu0
    %v364 = vadd.f32 %v83, %v363
    %v365 = vpop.f32.mrf.mxu0
    %v366 = vadd.f32 %v83, %v365
    %367 = vmatmul.bf16.gmra.mxu0 %v204
    %v368 = vpop.f32.mrf.mxu0
    %v369 = vadd.f32 %v83, %v368
    %v370 = vpop.f32.mrf.mxu0
    %v371 = vadd.f32 %v83, %v370
    %372 = vmatmul.bf16.gmra.mxu0 %v207
    %v373 = vpop.f32.mrf.mxu0
    %v374 = vadd.f32 %v83, %v373
    %v375 = vpop.f32.mrf.mxu0
    %v376 = vadd.f32 %v83, %v375
    %377 = vmatmul.bf16.gmra.mxu0 %v210
    %v378 = vpop.f32.mrf.mxu0
    %v379 = vadd.f32 %v83, %v378
    %v380 = vpop.f32.mrf.mxu0
    %v381 = vadd.f32 %v83, %v380
    %382 = vmatmul.bf16.gmra.mxu0 %v213
    %v383 = vpop.f32.mrf.mxu0
    %v384 = vadd.f32 %v83, %v383
    %v385 = vpop.f32.mrf.mxu0
    %v386 = vadd.f32 %v83, %v385
    %387 = vmatmul.bf16.gmra.mxu0 %v216
    %v388 = vpop.f32.mrf.mxu0
    %v389 = vadd.f32 %v83, %v388
    %v390 = vpop.f32.mrf.mxu0
    %v391 = vadd.f32 %v83, %v390
    %392 = vmatmul.bf16.gmra.mxu0 %v219
    %v393 = vpop.f32.mrf.mxu0
    %v394 = vadd.f32 %v83, %v393
    %v395 = vpop.f32.mrf.mxu0
    %v396 = vadd.f32 %v83, %v395
    %397 = vmatmul.bf16.gmra.mxu0 %v222
    %v398 = vpop.f32.mrf.mxu0
    %v399 = vadd.f32 %v83, %v398
    %v400 = vpop.f32.mrf.mxu0
    %v401 = vadd.f32 %v83, %v400
    %402 = vmatmul.bf16.gmra.mxu0 %v225
    %v403 = vpop.f32.mrf.mxu0
    %v404 = vadd.f32 %v83, %v403
    %v405 = vpop.f32.mrf.mxu0
    %v406 = vadd.f32 %v83, %v405
    %407 = vmatmul.bf16.gmra.mxu0 %v228
    %v408 = vpop.f32.mrf.mxu0
    %v409 = vadd.f32 %v83, %v408
    %v410 = vpop.f32.mrf.mxu0
    %v411 = vadd.f32 %v83, %v410
    %412 = vmatmul.bf16.gmra.mxu0 %v231
    %v413 = vpop.f32.mrf.mxu0
    %v414 = vadd.f32 %v83, %v413
    %v415 = vpop.f32.mrf.mxu0
    %v416 = vadd.f32 %v83, %v415
    %417 = vdwg.mxu0
    %v418 = vtanh.pop %v250
    %v419 = vtanh.pop %v339
    %v420 = vtanh.pop %v252
    %v421 = vtanh.pop %v341
    %v422 = vtanh.pop %v255
    %v423 = vtanh.pop %v344
    %v424 = vtanh.pop %v257
    %v425 = vtanh.pop %v346
    %v426 = vtanh.pop %v260
    %v427 = vtanh.pop %v349
    %v428 = vtanh.pop %v262
    %v429 = vtanh.pop %v351
    %v430 = vtanh.pop %v265
    %v431 = vtanh.pop %v354
    %v432 = vtanh.pop %v267
    %v433 = vtanh.pop %v356
    %v434 = vtanh.pop %v270
    %v435 = vtanh.pop %v359
    %v436 = vtanh.pop %v272
    %v437 = vtanh.pop %v361
    %v438 = vtanh.pop %v275
    %v439 = vtanh.pop %v364
    %v440 = vtanh.pop %v277
    %v441 = vtanh.pop %v366
    %v442 = vtanh.pop %v280
    %v443 = vtanh.pop %v369
    %v444 = vtanh.pop %v282
    %v445 = vtanh.pop %v371
    %v446 = vtanh.pop %v285
    %v447 = vtanh.pop %v374
    %v448 = vtanh.pop %v287
    %v449 = vtanh.pop %v376
    %v450 = vtanh.pop %v290
    %v451 = vtanh.pop %v379
    %v452 = vtanh.pop %v292
    %v453 = vtanh.pop %v381
    %v454 = vtanh.pop %v295
    %v455 = vtanh.pop %v384
    %v456 = vtanh.pop %v297
    %v457 = vtanh.pop %v386
    %v458 = vtanh.pop %v300
    %v459 = vtanh.pop %v389
    %v460 = vtanh.pop %v302
    %v461 = vtanh.pop %v391
    %v462 = vtanh.pop %v305
    %v463 = vtanh.pop %v394
    %v464 = vtanh.pop %v307
    %v465 = vtanh.pop %v396
    %v466 = vtanh.pop %v310
    %v467 = vtanh.pop %v399
    %v468 = vtanh.pop %v312
    %v469 = vtanh.pop %v401
    %v470 = vtanh.pop %v315
    %v471 = vtanh.pop %v404
    %v472 = vtanh.pop %v317
    %v473 = vtanh.pop %v406
    %v474 = vtanh.pop %v320
    %v475 = vtanh.pop %v409
    %v476 = vtanh.pop %v322
    %v477 = vtanh.pop %v411
    %v478 = vtanh.pop %v325
    %v479 = vtanh.pop %v414
    %v480 = vtanh.pop %v327
    %v481 = vtanh.pop %v416
    %v482 = vpack.c.bf16 %v420, %v418
    %v483 = vpack.c.bf16 %v421, %v419
    %v484 = vpack.c.bf16 %v424, %v422
    %v485 = vpack.c.bf16 %v425, %v423
    %v486 = vpack.c.bf16 %v428, %v426
    %v487 = vpack.c.bf16 %v429, %v427
    %v488 = vpack.c.bf16 %v432, %v430
    %v489 = vpack.c.bf16 %v433, %v431
    %v490 = vpack.c.bf16 %v436, %v434
    %v491 = vpack.c.bf16 %v437, %v435
    %v492 = vpack.c.bf16 %v440, %v438
    %v493 = vpack.c.bf16 %v441, %v439
    %v494 = vpack.c.bf16 %v444, %v442
    %v495 = vpack.c.bf16 %v445, %v443
    %v496 = vpack.c.bf16 %v448, %v446
    %v497 = vpack.c.bf16 %v449, %v447
    %v498 = vpack.c.bf16 %v452, %v450
    %v499 = vpack.c.bf16 %v453, %v451
    %v500 = vpack.c.bf16 %v456, %v454
    %v501 = vpack.c.bf16 %v457, %v455
    %v502 = vpack.c.bf16 %v460, %v458
    %v503 = vpack.c.bf16 %v461, %v459
    %v504 = vpack.c.bf16 %v464, %v462
    %v505 = vpack.c.bf16 %v465, %v463
    %v506 = vpack.c.bf16 %v468, %v466
    %v507 = vpack.c.bf16 %v469, %v467
    %v508 = vpack.c.bf16 %v472, %v470
    %v509 = vpack.c.bf16 %v473, %v471
    %v510 = vpack.c.bf16 %v476, %v474
    %v511 = vpack.c.bf16 %v477, %v475
    %v512 = vpack.c.bf16 %v480, %v478
    %v513 = vpack.c.bf16 %v481, %v479
    %v514 = vld [vmem:[#allocation2] sm:$0xff]
    %v515 = vld [vmem:[#allocation2 + $0x8] sm:$0xff]
    %v516 = vld [vmem:[#allocation2 + $0x10] sm:$0xff]
    %v517 = vld [vmem:[#allocation2 + $0x18] sm:$0xff]
    %v518 = vld [vmem:[#allocation2 + $0x20] sm:$0xff]
    %v519 = vld [vmem:[#allocation2 + $0x28] sm:$0xff]
    %v520 = vld [vmem:[#allocation2 + $0x30] sm:$0xff]
    %v521 = vld [vmem:[#allocation2 + $0x38] sm:$0xff]
    %v522 = vld [vmem:[#allocation2 + $0x40] sm:$0xff]
    %v523 = vld [vmem:[#allocation2 + $0x48] sm:$0xff]
    %v524 = vld [vmem:[#allocation2 + $0x50] sm:$0xff]
    %v525 = vld [vmem:[#allocation2 + $0x58] sm:$0xff]
    %v526 = vld [vmem:[#allocation2 + $0x60] sm:$0xff]
    %v527 = vld [vmem:[#allocation2 + $0x68] sm:$0xff]
    %v528 = vld [vmem:[#allocation2 + $0x70] sm:$0xff]
    %v529 = vld [vmem:[#allocation2 + $0x78] sm:$0xff]
    %v530 = vld [vmem:[#allocation2 + $0x80] sm:$0xff]
    %v531 = vld [vmem:[#allocation2 + $0x88] sm:$0xff]
    %v532 = vld [vmem:[#allocation2 + $0x90] sm:$0xff]
    %v533 = vld [vmem:[#allocation2 + $0x98] sm:$0xff]
    %v534 = vld [vmem:[#allocation2 + $0xa0] sm:$0xff]
    %v535 = vld [vmem:[#allocation2 + $0xa8] sm:$0xff]
    %v536 = vld [vmem:[#allocation2 + $0xb0] sm:$0xff]
    %v537 = vld [vmem:[#allocation2 + $0xb8] sm:$0xff]
    %v538 = vld [vmem:[#allocation2 + $0xc0] sm:$0xff]
    %v539 = vld [vmem:[#allocation2 + $0xc8] sm:$0xff]
    %v540 = vld [vmem:[#allocation2 + $0xd0] sm:$0xff]
    %v541 = vld [vmem:[#allocation2 + $0xd8] sm:$0xff]
    %v542 = vld [vmem:[#allocation2 + $0xe0] sm:$0xff]
    %v543 = vld [vmem:[#allocation2 + $0xe8] sm:$0xff]
    %v544 = vld [vmem:[#allocation2 + $0xf0] sm:$0xff]
    %v545 = vld [vmem:[#allocation2 + $0xf8] sm:$0xff]
    %v546 = vld [vmem:[%s4] sm:$0x3]
    %v548 = vperm.slane %v546, 0
    %v549 = vperm.slane %v546, 1
    %v584 = vunpack.c.l.b16 %v514
    %v585 = vunpack.c.h.b16 %v514
    %v586 = vunpack.c.l.b16 %v515
    %v587 = vunpack.c.h.b16 %v515
    %v588 = vunpack.c.l.b16 %v516
    %v589 = vunpack.c.h.b16 %v516
    %v590 = vunpack.c.l.b16 %v517
    %v591 = vunpack.c.h.b16 %v517
    %v592 = vunpack.c.l.b16 %v518
    %v593 = vunpack.c.h.b16 %v518
    %v594 = vunpack.c.l.b16 %v519
    %v595 = vunpack.c.h.b16 %v519
    %v596 = vunpack.c.l.b16 %v520
    %v597 = vunpack.c.h.b16 %v520
    %v598 = vunpack.c.l.b16 %v521
    %v599 = vunpack.c.h.b16 %v521
    %v600 = vunpack.c.l.b16 %v522
    %v601 = vunpack.c.h.b16 %v522
    %v602 = vunpack.c.l.b16 %v523
    %v603 = vunpack.c.h.b16 %v523
    %v604 = vunpack.c.l.b16 %v524
    %v605 = vunpack.c.h.b16 %v524
    %v606 = vunpack.c.l.b16 %v525
    %v607 = vunpack.c.h.b16 %v525
    %v608 = vunpack.c.l.b16 %v526
    %v609 = vunpack.c.h.b16 %v526
    %v610 = vunpack.c.l.b16 %v527
    %v611 = vunpack.c.h.b16 %v527
    %v612 = vunpack.c.l.b16 %v528
    %v613 = vunpack.c.h.b16 %v528
    %v614 = vunpack.c.l.b16 %v529
    %v615 = vunpack.c.h.b16 %v529
    %v616 = vunpack.c.l.b16 %v530
    %v617 = vunpack.c.h.b16 %v530
    %v618 = vunpack.c.l.b16 %v531
    %v619 = vunpack.c.h.b16 %v531
    %v620 = vunpack.c.l.b16 %v532
    %v621 = vunpack.c.h.b16 %v532
    %v622 = vunpack.c.l.b16 %v533
    %v623 = vunpack.c.h.b16 %v533
    %v624 = vunpack.c.l.b16 %v534
    %v625 = vunpack.c.h.b16 %v534
    %v626 = vunpack.c.l.b16 %v535
    %v627 = vunpack.c.h.b16 %v535
    %v628 = vunpack.c.l.b16 %v536
    %v629 = vunpack.c.h.b16 %v536
    %v630 = vunpack.c.l.b16 %v537
    %v631 = vunpack.c.h.b16 %v537
    %v632 = vunpack.c.l.b16 %v538
    %v633 = vunpack.c.h.b16 %v538
    %v634 = vunpack.c.l.b16 %v539
    %v635 = vunpack.c.h.b16 %v539
    %v636 = vunpack.c.l.b16 %v540
    %v637 = vunpack.c.h.b16 %v540
    %v638 = vunpack.c.l.b16 %v541
    %v639 = vunpack.c.h.b16 %v541
    %v640 = vunpack.c.l.b16 %v542
    %v641 = vunpack.c.h.b16 %v542
    %v642 = vunpack.c.l.b16 %v543
    %v643 = vunpack.c.h.b16 %v543
    %v644 = vunpack.c.l.b16 %v544
    %v645 = vunpack.c.h.b16 %v544
    %v646 = vunpack.c.l.b16 %v545
    %v647 = vunpack.c.h.b16 %v545
    %v648 = vpack.c.b16 %v586, %v584
    %v649 = vpack.c.b16 %v587, %v585
    %v650 = vpack.c.b16 %v590, %v588
    %v651 = vpack.c.b16 %v591, %v589
    %v652 = vpack.c.b16 %v594, %v592
    %v653 = vpack.c.b16 %v595, %v593
    %v654 = vpack.c.b16 %v598, %v596
    %v655 = vpack.c.b16 %v599, %v597
    %v656 = vpack.c.b16 %v602, %v600
    %v657 = vpack.c.b16 %v603, %v601
    %v658 = vpack.c.b16 %v606, %v604
    %v659 = vpack.c.b16 %v607, %v605
    %v660 = vpack.c.b16 %v610, %v608
    %v661 = vpack.c.b16 %v611, %v609
    %v662 = vpack.c.b16 %v614, %v612
    %v663 = vpack.c.b16 %v615, %v613
    %v664 = vpack.c.b16 %v618, %v616
    %v665 = vpack.c.b16 %v619, %v617
    %v666 = vpack.c.b16 %v622, %v620
    %v667 = vpack.c.b16 %v623, %v621
    %v668 = vpack.c.b16 %v626, %v624
    %v669 = vpack.c.b16 %v627, %v625
    %v670 = vpack.c.b16 %v630, %v628
    %v671 = vpack.c.b16 %v631, %v629
    %v672 = vpack.c.b16 %v634, %v632
    %v673 = vpack.c.b16 %v635, %v633
    %v674 = vpack.c.b16 %v638, %v636
    %v675 = vpack.c.b16 %v639, %v637
    %v676 = vpack.c.b16 %v642, %v640
    %v677 = vpack.c.b16 %v643, %v641
    %v678 = vpack.c.b16 %v646, %v644
    %v679 = vpack.c.b16 %v647, %v645
    %712 = vmatpush.bf16.msra.mxu0 %v662
    %713 = vmatpush.bf16.msra.mxu0 %v660
    %714 = vmatpush.bf16.msra.mxu0 %v658
    %715 = vmatpush.bf16.msra.mxu0 %v656
    %716 = vmatpush.bf16.msra.mxu0 %v654
    %717 = vmatpush.bf16.msra.mxu0 %v652
    %718 = vmatpush.bf16.msra.mxu0 %v650
    %719 = vmatpush.bf16.msra.mxu0 %v648
    %720 = vmatmul.bf16.gmra.mxu0 %v482
    %v721 = vpop.f32.mrf.mxu0
    %v722 = vadd.f32 %v548, %v721
    %v723 = vpop.f32.mrf.mxu0
    %v724 = vadd.f32 %v548, %v723
    %725 = vmatmul.bf16.gmra.mxu0 %v484
    %v726 = vpop.f32.mrf.mxu0
    %v727 = vadd.f32 %v548, %v726
    %v728 = vpop.f32.mrf.mxu0
    %v729 = vadd.f32 %v548, %v728
    %730 = vmatmul.bf16.gmra.mxu0 %v486
    %v731 = vpop.f32.mrf.mxu0
    %v732 = vadd.f32 %v548, %v731
    %v733 = vpop.f32.mrf.mxu0
    %v734 = vadd.f32 %v548, %v733
    %735 = vmatmul.bf16.gmra.mxu0 %v488
    %v736 = vpop.f32.mrf.mxu0
    %v737 = vadd.f32 %v548, %v736
    %v738 = vpop.f32.mrf.mxu0
    %v739 = vadd.f32 %v548, %v738
    %740 = vmatmul.bf16.gmra.mxu0 %v490
    %v741 = vpop.f32.mrf.mxu0
    %v742 = vadd.f32 %v548, %v741
    %v743 = vpop.f32.mrf.mxu0
    %v744 = vadd.f32 %v548, %v743
    %745 = vmatmul.bf16.gmra.mxu0 %v492
    %v746 = vpop.f32.mrf.mxu0
    %v747 = vadd.f32 %v548, %v746
    %v748 = vpop.f32.mrf.mxu0
    %v749 = vadd.f32 %v548, %v748
    %750 = vmatmul.bf16.gmra.mxu0 %v494
    %v751 = vpop.f32.mrf.mxu0
    %v752 = vadd.f32 %v548, %v751
    %v753 = vpop.f32.mrf.mxu0
    %v754 = vadd.f32 %v548, %v753
    %755 = vmatmul.bf16.gmra.mxu0 %v496
    %v756 = vpop.f32.mrf.mxu0
    %v757 = vadd.f32 %v548, %v756
    %v758 = vpop.f32.mrf.mxu0
    %v759 = vadd.f32 %v548, %v758
    %760 = vmatmul.bf16.gmra.mxu0 %v498
    %v761 = vpop.f32.mrf.mxu0
    %v762 = vadd.f32 %v548, %v761
    %v763 = vpop.f32.mrf.mxu0
    %v764 = vadd.f32 %v548, %v763
    %765 = vmatmul.bf16.gmra.mxu0 %v500
    %v766 = vpop.f32.mrf.mxu0
    %v767 = vadd.f32 %v548, %v766
    %v768 = vpop.f32.mrf.mxu0
    %v769 = vadd.f32 %v548, %v768
    %770 = vmatmul.bf16.gmra.mxu0 %v502
    %v771 = vpop.f32.mrf.mxu0
    %v772 = vadd.f32 %v548, %v771
    %v773 = vpop.f32.mrf.mxu0
    %v774 = vadd.f32 %v548, %v773
    %775 = vmatmul.bf16.gmra.mxu0 %v504
    %v776 = vpop.f32.mrf.mxu0
    %v777 = vadd.f32 %v548, %v776
    %v778 = vpop.f32.mrf.mxu0
    %v779 = vadd.f32 %v548, %v778
    %780 = vmatmul.bf16.gmra.mxu0 %v506
    %v781 = vpop.f32.mrf.mxu0
    %v782 = vadd.f32 %v548, %v781
    %v783 = vpop.f32.mrf.mxu0
    %v784 = vadd.f32 %v548, %v783
    %785 = vmatmul.bf16.gmra.mxu0 %v508
    %v786 = vpop.f32.mrf.mxu0
    %v787 = vadd.f32 %v548, %v786
    %v788 = vpop.f32.mrf.mxu0
    %v789 = vadd.f32 %v548, %v788
    %790 = vmatmul.bf16.gmra.mxu0 %v510
    %v791 = vpop.f32.mrf.mxu0
    %v792 = vadd.f32 %v548, %v791
    %v793 = vpop.f32.mrf.mxu0
    %v794 = vadd.f32 %v548, %v793
    %795 = vmatmul.bf16.gmra.mxu0 %v512
    %v796 = vpop.f32.mrf.mxu0
    %v797 = vadd.f32 %v548, %v796
    %v798 = vpop.f32.mrf.mxu0
    %v799 = vadd.f32 %v548, %v798
    %800 = vdwg.mxu0
    %801 = vmatpush.bf16.msra.mxu0 %v678
    %802 = vmatpush.bf16.msra.mxu0 %v676
    %803 = vmatpush.bf16.msra.mxu0 %v674
    %804 = vmatpush.bf16.msra.mxu0 %v672
    %805 = vmatpush.bf16.msra.mxu0 %v670
    %806 = vmatpush.bf16.msra.mxu0 %v668
    %807 = vmatpush.bf16.msra.mxu0 %v666
    %808 = vmatpush.bf16.msra.mxu0 %v664
    %809 = vmatmul.bf16.gmra.mxu0 %v483
    %v810 = vpop.f32.mrf.mxu0
    %v811 = vadd.f32 %v722, %v810
    %v812 = vpop.f32.mrf.mxu0
    %v813 = vadd.f32 %v724, %v812
    %814 = vmatmul.bf16.gmra.mxu0 %v485
    %v815 = vpop.f32.mrf.mxu0
    %v816 = vadd.f32 %v727, %v815
    %v817 = vpop.f32.mrf.mxu0
    %v818 = vadd.f32 %v729, %v817
    %819 = vmatmul.bf16.gmra.mxu0 %v487
    %v820 = vpop.f32.mrf.mxu0
    %v821 = vadd.f32 %v732, %v820
    %v822 = vpop.f32.mrf.mxu0
    %v823 = vadd.f32 %v734, %v822
    %824 = vmatmul.bf16.gmra.mxu0 %v489
    %v825 = vpop.f32.mrf.mxu0
    %v826 = vadd.f32 %v737, %v825
    %v827 = vpop.f32.mrf.mxu0
    %v828 = vadd.f32 %v739, %v827
    %829 = vmatmul.bf16.gmra.mxu0 %v491
    %v830 = vpop.f32.mrf.mxu0
    %v831 = vadd.f32 %v742, %v830
    %v832 = vpop.f32.mrf.mxu0
    %v833 = vadd.f32 %v744, %v832
    %834 = vmatmul.bf16.gmra.mxu0 %v493
    %v835 = vpop.f32.mrf.mxu0
    %v836 = vadd.f32 %v747, %v835
    %v837 = vpop.f32.mrf.mxu0
    %v838 = vadd.f32 %v749, %v837
    %839 = vmatmul.bf16.gmra.mxu0 %v495
    %v840 = vpop.f32.mrf.mxu0
    %v841 = vadd.f32 %v752, %v840
    %v842 = vpop.f32.mrf.mxu0
    %v843 = vadd.f32 %v754, %v842
    %844 = vmatmul.bf16.gmra.mxu0 %v497
    %v845 = vpop.f32.mrf.mxu0
    %v846 = vadd.f32 %v757, %v845
    %v847 = vpop.f32.mrf.mxu0
    %v848 = vadd.f32 %v759, %v847
    %849 = vmatmul.bf16.gmra.mxu0 %v499
    %v850 = vpop.f32.mrf.mxu0
    %v851 = vadd.f32 %v762, %v850
    %v852 = vpop.f32.mrf.mxu0
    %v853 = vadd.f32 %v764, %v852
    %854 = vmatmul.bf16.gmra.mxu0 %v501
    %v855 = vpop.f32.mrf.mxu0
    %v856 = vadd.f32 %v767, %v855
    %v857 = vpop.f32.mrf.mxu0
    %v858 = vadd.f32 %v769, %v857
    %859 = vmatmul.bf16.gmra.mxu0 %v503
    %v860 = vpop.f32.mrf.mxu0
    %v861 = vadd.f32 %v772, %v860
    %v862 = vpop.f32.mrf.mxu0
    %v863 = vadd.f32 %v774, %v862
    %864 = vmatmul.bf16.gmra.mxu0 %v505
    %v865 = vpop.f32.mrf.mxu0
    %v866 = vadd.f32 %v777, %v865
    %v867 = vpop.f32.mrf.mxu0
    %v868 = vadd.f32 %v779, %v867
    %869 = vmatmul.bf16.gmra.mxu0 %v507
    %v870 = vpop.f32.mrf.mxu0
    %v871 = vadd.f32 %v782, %v870
    %v872 = vpop.f32.mrf.mxu0
    %v873 = vadd.f32 %v784, %v872
    %874 = vmatmul.bf16.gmra.mxu0 %v509
    %v875 = vpop.f32.mrf.mxu0
    %v876 = vadd.f32 %v787, %v875
    %v877 = vpop.f32.mrf.mxu0
    %v878 = vadd.f32 %v789, %v877
    %879 = vmatmul.bf16.gmra.mxu0 %v511
    %v880 = vpop.f32.mrf.mxu0
    %v881 = vadd.f32 %v792, %v880
    %v882 = vpop.f32.mrf.mxu0
    %v883 = vadd.f32 %v794, %v882
    %884 = vmatmul.bf16.gmra.mxu0 %v513
    %v885 = vpop.f32.mrf.mxu0
    %v886 = vadd.f32 %v797, %v885
    %v887 = vpop.f32.mrf.mxu0
    %v888 = vadd.f32 %v799, %v887
    %889 = vdwg.mxu0
    %890 = vmatpush.bf16.msra.mxu0 %v663
    %891 = vmatpush.bf16.msra.mxu0 %v661
    %892 = vmatpush.bf16.msra.mxu0 %v659
    %893 = vmatpush.bf16.msra.mxu0 %v657
    %894 = vmatpush.bf16.msra.mxu0 %v655
    %895 = vmatpush.bf16.msra.mxu0 %v653
    %896 = vmatpush.bf16.msra.mxu0 %v651
    %897 = vmatpush.bf16.msra.mxu0 %v649
    %898 = vmatmul.bf16.gmra.mxu0 %v482
    %v899 = vpop.f32.mrf.mxu0
    %v900 = vadd.f32 %v549, %v899
    %v901 = vpop.f32.mrf.mxu0
    %v902 = vadd.f32 %v549, %v901
    %903 = vmatmul.bf16.gmra.mxu0 %v484
    %v904 = vpop.f32.mrf.mxu0
    %v905 = vadd.f32 %v549, %v904
    %v906 = vpop.f32.mrf.mxu0
    %v907 = vadd.f32 %v549, %v906
    %908 = vmatmul.bf16.gmra.mxu0 %v486
    %v909 = vpop.f32.mrf.mxu0
    %v910 = vadd.f32 %v549, %v909
    %v911 = vpop.f32.mrf.mxu0
    %v912 = vadd.f32 %v549, %v911
    %913 = vmatmul.bf16.gmra.mxu0 %v488
    %v914 = vpop.f32.mrf.mxu0
    %v915 = vadd.f32 %v549, %v914
    %v916 = vpop.f32.mrf.mxu0
    %v917 = vadd.f32 %v549, %v916
    %918 = vmatmul.bf16.gmra.mxu0 %v490
    %v919 = vpop.f32.mrf.mxu0
    %v920 = vadd.f32 %v549, %v919
    %v921 = vpop.f32.mrf.mxu0
    %v922 = vadd.f32 %v549, %v921
    %923 = vmatmul.bf16.gmra.mxu0 %v492
    %v924 = vpop.f32.mrf.mxu0
    %v925 = vadd.f32 %v549, %v924
    %v926 = vpop.f32.mrf.mxu0
    %v927 = vadd.f32 %v549, %v926
    %928 = vmatmul.bf16.gmra.mxu0 %v494
    %v929 = vpop.f32.mrf.mxu0
    %v930 = vadd.f32 %v549, %v929
    %v931 = vpop.f32.mrf.mxu0
    %v932 = vadd.f32 %v549, %v931
    %933 = vmatmul.bf16.gmra.mxu0 %v496
    %v934 = vpop.f32.mrf.mxu0
    %v935 = vadd.f32 %v549, %v934
    %v936 = vpop.f32.mrf.mxu0
    %v937 = vadd.f32 %v549, %v936
    %938 = vmatmul.bf16.gmra.mxu0 %v498
    %v939 = vpop.f32.mrf.mxu0
    %v940 = vadd.f32 %v549, %v939
    %v941 = vpop.f32.mrf.mxu0
    %v942 = vadd.f32 %v549, %v941
    %943 = vmatmul.bf16.gmra.mxu0 %v500
    %v944 = vpop.f32.mrf.mxu0
    %v945 = vadd.f32 %v549, %v944
    %v946 = vpop.f32.mrf.mxu0
    %v947 = vadd.f32 %v549, %v946
    %948 = vmatmul.bf16.gmra.mxu0 %v502
    %v949 = vpop.f32.mrf.mxu0
    %v950 = vadd.f32 %v549, %v949
    %v951 = vpop.f32.mrf.mxu0
    %v952 = vadd.f32 %v549, %v951
    %953 = vmatmul.bf16.gmra.mxu0 %v504
    %v954 = vpop.f32.mrf.mxu0
    %v955 = vadd.f32 %v549, %v954
    %v956 = vpop.f32.mrf.mxu0
    %v957 = vadd.f32 %v549, %v956
    %958 = vmatmul.bf16.gmra.mxu0 %v506
    %v959 = vpop.f32.mrf.mxu0
    %v960 = vadd.f32 %v549, %v959
    %v961 = vpop.f32.mrf.mxu0
    %v962 = vadd.f32 %v549, %v961
    %963 = vmatmul.bf16.gmra.mxu0 %v508
    %v964 = vpop.f32.mrf.mxu0
    %v965 = vadd.f32 %v549, %v964
    %v966 = vpop.f32.mrf.mxu0
    %v967 = vadd.f32 %v549, %v966
    %968 = vmatmul.bf16.gmra.mxu0 %v510
    %v969 = vpop.f32.mrf.mxu0
    %v970 = vadd.f32 %v549, %v969
    %v971 = vpop.f32.mrf.mxu0
    %v972 = vadd.f32 %v549, %v971
    %973 = vmatmul.bf16.gmra.mxu0 %v512
    %v974 = vpop.f32.mrf.mxu0
    %v975 = vadd.f32 %v549, %v974
    %v976 = vpop.f32.mrf.mxu0
    %v977 = vadd.f32 %v549, %v976
    %978 = vdwg.mxu0
    %979 = vmatpush.bf16.msra.mxu0 %v679
    %980 = vmatpush.bf16.msra.mxu0 %v677
    %981 = vmatpush.bf16.msra.mxu0 %v675
    %982 = vmatpush.bf16.msra.mxu0 %v673
    %983 = vmatpush.bf16.msra.mxu0 %v671
    %984 = vmatpush.bf16.msra.mxu0 %v669
    %985 = vmatpush.bf16.msra.mxu0 %v667
    %986 = vmatpush.bf16.msra.mxu0 %v665
    %987 = vmatmul.bf16.gmra.mxu0 %v483
    %v988 = vpop.f32.mrf.mxu0
    %v989 = vadd.f32 %v900, %v988
    %v990 = vpop.f32.mrf.mxu0
    %v991 = vadd.f32 %v902, %v990
    %992 = vmatmul.bf16.gmra.mxu0 %v485
    %v993 = vpop.f32.mrf.mxu0
    %v994 = vadd.f32 %v905, %v993
    %v995 = vpop.f32.mrf.mxu0
    %v996 = vadd.f32 %v907, %v995
    %997 = vmatmul.bf16.gmra.mxu0 %v487
    %v998 = vpop.f32.mrf.mxu0
    %v999 = vadd.f32 %v910, %v998
    %v1000 = vpop.f32.mrf.mxu0
    %v1001 = vadd.f32 %v912, %v1000
    %1002 = vmatmul.bf16.gmra.mxu0 %v489
    %v1003 = vpop.f32.mrf.mxu0
    %v1004 = vadd.f32 %v915, %v1003
    %v1005 = vpop.f32.mrf.mxu0
    %v1006 = vadd.f32 %v917, %v1005
    %1007 = vmatmul.bf16.gmra.mxu0 %v491
    %v1008 = vpop.f32.mrf.mxu0
    %v1009 = vadd.f32 %v920, %v1008
    %v1010 = vpop.f32.mrf.mxu0
    %v1011 = vadd.f32 %v922, %v1010
    %1012 = vmatmul.bf16.gmra.mxu0 %v493
    %v1013 = vpop.f32.mrf.mxu0
    %v1014 = vadd.f32 %v925, %v1013
    %v1015 = vpop.f32.mrf.mxu0
    %v1016 = vadd.f32 %v927, %v1015
    %1017 = vmatmul.bf16.gmra.mxu0 %v495
    %v1018 = vpop.f32.mrf.mxu0
    %v1019 = vadd.f32 %v930, %v1018
    %v1020 = vpop.f32.mrf.mxu0
    %v1021 = vadd.f32 %v932, %v1020
    %1022 = vmatmul.bf16.gmra.mxu0 %v497
    %v1023 = vpop.f32.mrf.mxu0
    %v1024 = vadd.f32 %v935, %v1023
    %v1025 = vpop.f32.mrf.mxu0
    %v1026 = vadd.f32 %v937, %v1025
    %1027 = vmatmul.bf16.gmra.mxu0 %v499
    %v1028 = vpop.f32.mrf.mxu0
    %v1029 = vadd.f32 %v940, %v1028
    %v1030 = vpop.f32.mrf.mxu0
    %v1031 = vadd.f32 %v942, %v1030
    %1032 = vmatmul.bf16.gmra.mxu0 %v501
    %v1033 = vpop.f32.mrf.mxu0
    %v1034 = vadd.f32 %v945, %v1033
    %v1035 = vpop.f32.mrf.mxu0
    %v1036 = vadd.f32 %v947, %v1035
    %1037 = vmatmul.bf16.gmra.mxu0 %v503
    %v1038 = vpop.f32.mrf.mxu0
    %v1039 = vadd.f32 %v950, %v1038
    %v1040 = vpop.f32.mrf.mxu0
    %v1041 = vadd.f32 %v952, %v1040
    %1042 = vmatmul.bf16.gmra.mxu0 %v505
    %v1043 = vpop.f32.mrf.mxu0
    %v1044 = vadd.f32 %v955, %v1043
    %v1045 = vpop.f32.mrf.mxu0
    %v1046 = vadd.f32 %v957, %v1045
    %1047 = vmatmul.bf16.gmra.mxu0 %v507
    %v1048 = vpop.f32.mrf.mxu0
    %v1049 = vadd.f32 %v960, %v1048
    %v1050 = vpop.f32.mrf.mxu0
    %v1051 = vadd.f32 %v962, %v1050
    %1052 = vmatmul.bf16.gmra.mxu0 %v509
    %v1053 = vpop.f32.mrf.mxu0
    %v1054 = vadd.f32 %v965, %v1053
    %v1055 = vpop.f32.mrf.mxu0
    %v1056 = vadd.f32 %v967, %v1055
    %1057 = vmatmul.bf16.gmra.mxu0 %v511
    %v1058 = vpop.f32.mrf.mxu0
    %v1059 = vadd.f32 %v970, %v1058
    %v1060 = vpop.f32.mrf.mxu0
    %v1061 = vadd.f32 %v972, %v1060
    %1062 = vmatmul.bf16.gmra.mxu0 %v513
    %v1063 = vpop.f32.mrf.mxu0
    %v1064 = vadd.f32 %v975, %v1063
    %v1065 = vpop.f32.mrf.mxu0
    %v1066 = vadd.f32 %v977, %v1065
    %1067 = vdwg.mxu0
    %v1068 = vtanh.pop %v811
    %v1069 = vtanh.pop %v989
    %v1070 = vtanh.pop %v813
    %v1071 = vtanh.pop %v991
    %v1072 = vtanh.pop %v816
    %v1073 = vtanh.pop %v994
    %v1074 = vtanh.pop %v818
    %v1075 = vtanh.pop %v996
    %v1076 = vtanh.pop %v821
    %v1077 = vtanh.pop %v999
    %v1078 = vtanh.pop %v823
    %v1079 = vtanh.pop %v1001
    %v1080 = vtanh.pop %v826
    %v1081 = vtanh.pop %v1004
    %v1082 = vtanh.pop %v828
    %v1083 = vtanh.pop %v1006
    %v1084 = vtanh.pop %v831
    %v1085 = vtanh.pop %v1009
    %v1086 = vtanh.pop %v833
    %v1087 = vtanh.pop %v1011
    %v1088 = vtanh.pop %v836
    %v1089 = vtanh.pop %v1014
    %v1090 = vtanh.pop %v838
    %v1091 = vtanh.pop %v1016
    %v1092 = vtanh.pop %v841
    %v1093 = vtanh.pop %v1019
    %v1094 = vtanh.pop %v843
    %v1095 = vtanh.pop %v1021
    %v1096 = vtanh.pop %v846
    %v1097 = vtanh.pop %v1024
    %v1098 = vtanh.pop %v848
    %v1099 = vtanh.pop %v1026
    %v1100 = vtanh.pop %v851
    %v1101 = vtanh.pop %v1029
    %v1102 = vtanh.pop %v853
    %v1103 = vtanh.pop %v1031
    %v1104 = vtanh.pop %v856
    %v1105 = vtanh.pop %v1034
    %v1106 = vtanh.pop %v858
    %v1107 = vtanh.pop %v1036
    %v1108 = vtanh.pop %v861
    %v1109 = vtanh.pop %v1039
    %v1110 = vtanh.pop %v863
    %v1111 = vtanh.pop %v1041
    %v1112 = vtanh.pop %v866
    %v1113 = vtanh.pop %v1044
    %v1114 = vtanh.pop %v868
    %v1115 = vtanh.pop %v1046
    %v1116 = vtanh.pop %v871
    %v1117 = vtanh.pop %v1049
    %v1118 = vtanh.pop %v873
    %v1119 = vtanh.pop %v1051
    %v1120 = vtanh.pop %v876
    %v1121 = vtanh.pop %v1054
    %v1122 = vtanh.pop %v878
    %v1123 = vtanh.pop %v1056
    %v1124 = vtanh.pop %v881
    %v1125 = vtanh.pop %v1059
    %v1126 = vtanh.pop %v883
    %v1127 = vtanh.pop %v1061
    %v1128 = vtanh.pop %v886
    %v1129 = vtanh.pop %v1064
    %v1130 = vtanh.pop %v888
    %v1131 = vtanh.pop %v1066
    %v1132 = vpack.c.bf16 %v1070, %v1068
    %v1133 = vpack.c.bf16 %v1071, %v1069
    %v1134 = vpack.c.bf16 %v1074, %v1072
    %v1135 = vpack.c.bf16 %v1075, %v1073
    %v1136 = vpack.c.bf16 %v1078, %v1076
    %v1137 = vpack.c.bf16 %v1079, %v1077
    %v1138 = vpack.c.bf16 %v1082, %v1080
    %v1139 = vpack.c.bf16 %v1083, %v1081
    %v1140 = vpack.c.bf16 %v1086, %v1084
    %v1141 = vpack.c.bf16 %v1087, %v1085
    %v1142 = vpack.c.bf16 %v1090, %v1088
    %v1143 = vpack.c.bf16 %v1091, %v1089
    %v1144 = vpack.c.bf16 %v1094, %v1092
    %v1145 = vpack.c.bf16 %v1095, %v1093
    %v1146 = vpack.c.bf16 %v1098, %v1096
    %v1147 = vpack.c.bf16 %v1099, %v1097
    %v1148 = vpack.c.bf16 %v1102, %v1100
    %v1149 = vpack.c.bf16 %v1103, %v1101
    %v1150 = vpack.c.bf16 %v1106, %v1104
    %v1151 = vpack.c.bf16 %v1107, %v1105
    %v1152 = vpack.c.bf16 %v1110, %v1108
    %v1153 = vpack.c.bf16 %v1111, %v1109
    %v1154 = vpack.c.bf16 %v1114, %v1112
    %v1155 = vpack.c.bf16 %v1115, %v1113
    %v1156 = vpack.c.bf16 %v1118, %v1116
    %v1157 = vpack.c.bf16 %v1119, %v1117
    %v1158 = vpack.c.bf16 %v1122, %v1120
    %v1159 = vpack.c.bf16 %v1123, %v1121
    %v1160 = vpack.c.bf16 %v1126, %v1124
    %v1161 = vpack.c.bf16 %v1127, %v1125
    %v1162 = vpack.c.bf16 %v1130, %v1128
    %v1163 = vpack.c.bf16 %v1131, %v1129
    %v1164 = vld [vmem:[%s5] sm:$0xf]
    %v1165 = vld [vmem:[%s5 + $0x4] sm:$0xf]
    %v1166 = vld [vmem:[%s5 + $0x8] sm:$0xf]
    %v1167 = vld [vmem:[%s5 + $0xc] sm:$0xf]
    %v1168 = vld [vmem:[%s5 + $0x10] sm:$0xf]
    %v1169 = vld [vmem:[%s5 + $0x14] sm:$0xf]
    %v1170 = vld [vmem:[%s5 + $0x18] sm:$0xf]
    %v1171 = vld [vmem:[%s5 + $0x1c] sm:$0xf]
    %v1172 = vld [vmem:[%s5 + $0x20] sm:$0xf]
    %v1173 = vld [vmem:[%s5 + $0x24] sm:$0xf]
    %v1174 = vld [vmem:[%s5 + $0x28] sm:$0xf]
    %v1175 = vld [vmem:[%s5 + $0x2c] sm:$0xf]
    %v1176 = vld [vmem:[%s5 + $0x30] sm:$0xf]
    %v1177 = vld [vmem:[%s5 + $0x34] sm:$0xf]
    %v1178 = vld [vmem:[%s5 + $0x38] sm:$0xf]
    %v1179 = vld [vmem:[%s5 + $0x3c] sm:$0xf]
    %v1180 = vld [vmem:[%s5 + $0x40] sm:$0xf]
    %v1181 = vld [vmem:[%s5 + $0x44] sm:$0xf]
    %v1182 = vld [vmem:[%s5 + $0x48] sm:$0xf]
    %v1183 = vld [vmem:[%s5 + $0x4c] sm:$0xf]
    %v1184 = vld [vmem:[%s5 + $0x50] sm:$0xf]
    %v1185 = vld [vmem:[%s5 + $0x54] sm:$0xf]
    %v1186 = vld [vmem:[%s5 + $0x58] sm:$0xf]
    %v1187 = vld [vmem:[%s5 + $0x5c] sm:$0xf]
    %v1188 = vld [vmem:[%s5 + $0x60] sm:$0xf]
    %v1189 = vld [vmem:[%s5 + $0x64] sm:$0xf]
    %v1190 = vld [vmem:[%s5 + $0x68] sm:$0xf]
    %v1191 = vld [vmem:[%s5 + $0x6c] sm:$0xf]
    %v1192 = vld [vmem:[%s5 + $0x70] sm:$0xf]
    %v1193 = vld [vmem:[%s5 + $0x74] sm:$0xf]
    %v1194 = vld [vmem:[%s5 + $0x78] sm:$0xf]
    %v1195 = vld [vmem:[%s5 + $0x7c] sm:$0xf]
    %v1196 = vld [vmem:[%s6] sm:$0x1]
    %v1198 = vperm.slane %v1196, 0
    %v1232 = vunpack.c.l.b16 %v1164
    %v1233 = vunpack.c.l.b16 %v1165
    %v1234 = vunpack.c.l.b16 %v1166
    %v1235 = vunpack.c.l.b16 %v1167
    %v1236 = vunpack.c.l.b16 %v1168
    %v1237 = vunpack.c.l.b16 %v1169
    %v1238 = vunpack.c.l.b16 %v1170
    %v1239 = vunpack.c.l.b16 %v1171
    %v1240 = vunpack.c.l.b16 %v1172
    %v1241 = vunpack.c.l.b16 %v1173
    %v1242 = vunpack.c.l.b16 %v1174
    %v1243 = vunpack.c.l.b16 %v1175
    %v1244 = vunpack.c.l.b16 %v1176
    %v1245 = vunpack.c.l.b16 %v1177
    %v1246 = vunpack.c.l.b16 %v1178
    %v1247 = vunpack.c.l.b16 %v1179
    %v1248 = vunpack.c.l.b16 %v1180
    %v1249 = vunpack.c.l.b16 %v1181
    %v1250 = vunpack.c.l.b16 %v1182
    %v1251 = vunpack.c.l.b16 %v1183
    %v1252 = vunpack.c.l.b16 %v1184
    %v1253 = vunpack.c.l.b16 %v1185
    %v1254 = vunpack.c.l.b16 %v1186
    %v1255 = vunpack.c.l.b16 %v1187
    %v1256 = vunpack.c.l.b16 %v1188
    %v1257 = vunpack.c.l.b16 %v1189
    %v1258 = vunpack.c.l.b16 %v1190
    %v1259 = vunpack.c.l.b16 %v1191
    %v1260 = vunpack.c.l.b16 %v1192
    %v1261 = vunpack.c.l.b16 %v1193
    %v1262 = vunpack.c.l.b16 %v1194
    %v1263 = vunpack.c.l.b16 %v1195
    %v1264 = vpack.c.b16 %v1233, %v1232
    %v1265 = vpack.c.b16 %v1235, %v1234
    %v1266 = vpack.c.b16 %v1237, %v1236
    %v1267 = vpack.c.b16 %v1239, %v1238
    %v1268 = vpack.c.b16 %v1241, %v1240
    %v1269 = vpack.c.b16 %v1243, %v1242
    %v1270 = vpack.c.b16 %v1245, %v1244
    %v1271 = vpack.c.b16 %v1247, %v1246
    %v1272 = vpack.c.b16 %v1249, %v1248
    %v1273 = vpack.c.b16 %v1251, %v1250
    %v1274 = vpack.c.b16 %v1253, %v1252
    %v1275 = vpack.c.b16 %v1255, %v1254
    %v1276 = vpack.c.b16 %v1257, %v1256
    %v1277 = vpack.c.b16 %v1259, %v1258
    %v1278 = vpack.c.b16 %v1261, %v1260
    %v1279 = vpack.c.b16 %v1263, %v1262
    %1296 = vmatpush.bf16.msra.mxu0 %v1271
    %1297 = vmatpush.bf16.msra.mxu0 %v1270
    %1298 = vmatpush.bf16.msra.mxu0 %v1269
    %1299 = vmatpush.bf16.msra.mxu0 %v1268
    %1300 = vmatpush.bf16.msra.mxu0 %v1267
    %1301 = vmatpush.bf16.msra.mxu0 %v1266
    %1302 = vmatpush.bf16.msra.mxu0 %v1265
    %1303 = vmatpush.bf16.msra.mxu0 %v1264
    %1304 = vmatmul.bf16.gmra.mxu0 %v1132
    %v1305 = vpop.f32.mrf.mxu0
    %v1306 = vadd.f32 %v1198, %v1305
    %v1307 = vpop.f32.mrf.mxu0
    %v1308 = vadd.f32 %v1198, %v1307
    %1309 = vmatmul.bf16.gmra.mxu0 %v1134
    %v1310 = vpop.f32.mrf.mxu0
    %v1311 = vadd.f32 %v1198, %v1310
    %v1312 = vpop.f32.mrf.mxu0
    %v1313 = vadd.f32 %v1198, %v1312
    %1314 = vmatmul.bf16.gmra.mxu0 %v1136
    %v1315 = vpop.f32.mrf.mxu0
    %v1316 = vadd.f32 %v1198, %v1315
    %v1317 = vpop.f32.mrf.mxu0
    %v1318 = vadd.f32 %v1198, %v1317
    %1319 = vmatmul.bf16.gmra.mxu0 %v1138
    %v1320 = vpop.f32.mrf.mxu0
    %v1321 = vadd.f32 %v1198, %v1320
    %v1322 = vpop.f32.mrf.mxu0
    %v1323 = vadd.f32 %v1198, %v1322
    %1324 = vmatmul.bf16.gmra.mxu0 %v1140
    %v1325 = vpop.f32.mrf.mxu0
    %v1326 = vadd.f32 %v1198, %v1325
    %v1327 = vpop.f32.mrf.mxu0
    %v1328 = vadd.f32 %v1198, %v1327
    %1329 = vmatmul.bf16.gmra.mxu0 %v1142
    %v1330 = vpop.f32.mrf.mxu0
    %v1331 = vadd.f32 %v1198, %v1330
    %v1332 = vpop.f32.mrf.mxu0
    %v1333 = vadd.f32 %v1198, %v1332
    %1334 = vmatmul.bf16.gmra.mxu0 %v1144
    %v1335 = vpop.f32.mrf.mxu0
    %v1336 = vadd.f32 %v1198, %v1335
    %v1337 = vpop.f32.mrf.mxu0
    %v1338 = vadd.f32 %v1198, %v1337
    %1339 = vmatmul.bf16.gmra.mxu0 %v1146
    %v1340 = vpop.f32.mrf.mxu0
    %v1341 = vadd.f32 %v1198, %v1340
    %v1342 = vpop.f32.mrf.mxu0
    %v1343 = vadd.f32 %v1198, %v1342
    %1344 = vmatmul.bf16.gmra.mxu0 %v1148
    %v1345 = vpop.f32.mrf.mxu0
    %v1346 = vadd.f32 %v1198, %v1345
    %v1347 = vpop.f32.mrf.mxu0
    %v1348 = vadd.f32 %v1198, %v1347
    %1349 = vmatmul.bf16.gmra.mxu0 %v1150
    %v1350 = vpop.f32.mrf.mxu0
    %v1351 = vadd.f32 %v1198, %v1350
    %v1352 = vpop.f32.mrf.mxu0
    %v1353 = vadd.f32 %v1198, %v1352
    %1354 = vmatmul.bf16.gmra.mxu0 %v1152
    %v1355 = vpop.f32.mrf.mxu0
    %v1356 = vadd.f32 %v1198, %v1355
    %v1357 = vpop.f32.mrf.mxu0
    %v1358 = vadd.f32 %v1198, %v1357
    %1359 = vmatmul.bf16.gmra.mxu0 %v1154
    %v1360 = vpop.f32.mrf.mxu0
    %v1361 = vadd.f32 %v1198, %v1360
    %v1362 = vpop.f32.mrf.mxu0
    %v1363 = vadd.f32 %v1198, %v1362
    %1364 = vmatmul.bf16.gmra.mxu0 %v1156
    %v1365 = vpop.f32.mrf.mxu0
    %v1366 = vadd.f32 %v1198, %v1365
    %v1367 = vpop.f32.mrf.mxu0
    %v1368 = vadd.f32 %v1198, %v1367
    %1369 = vmatmul.bf16.gmra.mxu0 %v1158
    %v1370 = vpop.f32.mrf.mxu0
    %v1371 = vadd.f32 %v1198, %v1370
    %v1372 = vpop.f32.mrf.mxu0
    %v1373 = vadd.f32 %v1198, %v1372
    %1374 = vmatmul.bf16.gmra.mxu0 %v1160
    %v1375 = vpop.f32.mrf.mxu0
    %v1376 = vadd.f32 %v1198, %v1375
    %v1377 = vpop.f32.mrf.mxu0
    %v1378 = vadd.f32 %v1198, %v1377
    %1379 = vmatmul.bf16.gmra.mxu0 %v1162
    %v1380 = vpop.f32.mrf.mxu0
    %v1381 = vadd.f32 %v1198, %v1380
    %v1382 = vpop.f32.mrf.mxu0
    %v1383 = vadd.f32 %v1198, %v1382
    %1384 = vdwg.mxu0
    %1385 = vmatpush.bf16.msra.mxu0 %v1279
    %1386 = vmatpush.bf16.msra.mxu0 %v1278
    %1387 = vmatpush.bf16.msra.mxu0 %v1277
    %1388 = vmatpush.bf16.msra.mxu0 %v1276
    %1389 = vmatpush.bf16.msra.mxu0 %v1275
    %1390 = vmatpush.bf16.msra.mxu0 %v1274
    %1391 = vmatpush.bf16.msra.mxu0 %v1273
    %1392 = vmatpush.bf16.msra.mxu0 %v1272
    %1393 = vmatmul.bf16.gmra.mxu0 %v1133
    %v1394 = vpop.f32.mrf.mxu0
    %v1395 = vadd.f32 %v1306, %v1394
    %v1396 = vpop.f32.mrf.mxu0
    %v1397 = vadd.f32 %v1308, %v1396
    %1398 = vmatmul.bf16.gmra.mxu0 %v1135
    %v1399 = vpop.f32.mrf.mxu0
    %v1400 = vadd.f32 %v1311, %v1399
    %v1401 = vpop.f32.mrf.mxu0
    %v1402 = vadd.f32 %v1313, %v1401
    %1403 = vmatmul.bf16.gmra.mxu0 %v1137
    %v1404 = vpop.f32.mrf.mxu0
    %v1405 = vadd.f32 %v1316, %v1404
    %v1406 = vpop.f32.mrf.mxu0
    %v1407 = vadd.f32 %v1318, %v1406
    %1408 = vmatmul.bf16.gmra.mxu0 %v1139
    %v1409 = vpop.f32.mrf.mxu0
    %v1410 = vadd.f32 %v1321, %v1409
    %v1411 = vpop.f32.mrf.mxu0
    %v1412 = vadd.f32 %v1323, %v1411
    %1413 = vmatmul.bf16.gmra.mxu0 %v1141
    %v1414 = vpop.f32.mrf.mxu0
    %v1415 = vadd.f32 %v1326, %v1414
    %v1416 = vpop.f32.mrf.mxu0
    %v1417 = vadd.f32 %v1328, %v1416
    %1418 = vmatmul.bf16.gmra.mxu0 %v1143
    %v1419 = vpop.f32.mrf.mxu0
    %v1420 = vadd.f32 %v1331, %v1419
    %v1421 = vpop.f32.mrf.mxu0
    %v1422 = vadd.f32 %v1333, %v1421
    %1423 = vmatmul.bf16.gmra.mxu0 %v1145
    %v1424 = vpop.f32.mrf.mxu0
    %v1425 = vadd.f32 %v1336, %v1424
    %v1426 = vpop.f32.mrf.mxu0
    %v1427 = vadd.f32 %v1338, %v1426
    %1428 = vmatmul.bf16.gmra.mxu0 %v1147
    %v1429 = vpop.f32.mrf.mxu0
    %v1430 = vadd.f32 %v1341, %v1429
    %v1431 = vpop.f32.mrf.mxu0
    %v1432 = vadd.f32 %v1343, %v1431
    %1433 = vmatmul.bf16.gmra.mxu0 %v1149
    %v1434 = vpop.f32.mrf.mxu0
    %v1435 = vadd.f32 %v1346, %v1434
    %v1436 = vpop.f32.mrf.mxu0
    %v1437 = vadd.f32 %v1348, %v1436
    %1438 = vmatmul.bf16.gmra.mxu0 %v1151
    %v1439 = vpop.f32.mrf.mxu0
    %v1440 = vadd.f32 %v1351, %v1439
    %v1441 = vpop.f32.mrf.mxu0
    %v1442 = vadd.f32 %v1353, %v1441
    %1443 = vmatmul.bf16.gmra.mxu0 %v1153
    %v1444 = vpop.f32.mrf.mxu0
    %v1445 = vadd.f32 %v1356, %v1444
    %v1446 = vpop.f32.mrf.mxu0
    %v1447 = vadd.f32 %v1358, %v1446
    %1448 = vmatmul.bf16.gmra.mxu0 %v1155
    %v1449 = vpop.f32.mrf.mxu0
    %v1450 = vadd.f32 %v1361, %v1449
    %v1451 = vpop.f32.mrf.mxu0
    %v1452 = vadd.f32 %v1363, %v1451
    %1453 = vmatmul.bf16.gmra.mxu0 %v1157
    %v1454 = vpop.f32.mrf.mxu0
    %v1455 = vadd.f32 %v1366, %v1454
    %v1456 = vpop.f32.mrf.mxu0
    %v1457 = vadd.f32 %v1368, %v1456
    %1458 = vmatmul.bf16.gmra.mxu0 %v1159
    %v1459 = vpop.f32.mrf.mxu0
    %v1460 = vadd.f32 %v1371, %v1459
    %v1461 = vpop.f32.mrf.mxu0
    %v1462 = vadd.f32 %v1373, %v1461
    %1463 = vmatmul.bf16.gmra.mxu0 %v1161
    %v1464 = vpop.f32.mrf.mxu0
    %v1465 = vadd.f32 %v1376, %v1464
    %v1466 = vpop.f32.mrf.mxu0
    %v1467 = vadd.f32 %v1378, %v1466
    %1468 = vmatmul.bf16.gmra.mxu0 %v1163
    %v1469 = vpop.f32.mrf.mxu0
    %v1470 = vadd.f32 %v1381, %v1469
    %v1471 = vpop.f32.mrf.mxu0
    %v1472 = vadd.f32 %v1383, %v1471
    %1473 = vdwg.mxu0
    %1474 = vxpose.xlu0.b32.start [1/16] %v1395, 128
    %1475 = vxpose.xlu0.b32.cont [2/16] %v1397, 128
    %1476 = vxpose.xlu0.b32.cont [3/16] %v1400, 128
    %1477 = vxpose.xlu0.b32.cont [4/16] %v1402, 128
    %1478 = vxpose.xlu0.b32.cont [5/16] %v1405, 128
    %1479 = vxpose.xlu0.b32.cont [6/16] %v1407, 128
    %1480 = vxpose.xlu0.b32.cont [7/16] %v1410, 128
    %1481 = vxpose.xlu0.b32.cont [8/16] %v1412, 128
    %1482 = vxpose.xlu0.b32.cont [9/16] %v1415, 128
    %1483 = vxpose.xlu0.b32.cont [10/16] %v1417, 128
    %1484 = vxpose.xlu0.b32.cont [11/16] %v1420, 128
    %1485 = vxpose.xlu0.b32.cont [12/16] %v1422, 128
    %1486 = vxpose.xlu0.b32.cont [13/16] %v1425, 128
    %1487 = vxpose.xlu0.b32.cont [14/16] %v1427, 128
    %1488 = vxpose.xlu0.b32.cont [15/16] %v1430, 128
    %1489 = vxpose.xlu0.b32.end [16/16] %v1432, 128
    %v1490 = vpop.trf.xlu0
    %v1491 = vpop.trf.xlu0
    %v1492 = vpop.trf.xlu0
    %v1493 = vpop.trf.xlu0
    %v1494 = vpop.trf.xlu0
    %v1495 = vpop.trf.xlu0
    %v1496 = vpop.trf.xlu0
    %v1497 = vpop.trf.xlu0
    %v1498 = vpop.trf.xlu0
    %v1499 = vpop.trf.xlu0
    %v1500 = vpop.trf.xlu0
    %v1501 = vpop.trf.xlu0
    %v1502 = vpop.trf.xlu0
    %v1503 = vpop.trf.xlu0
    %v1504 = vpop.trf.xlu0
    %v1505 = vpop.trf.xlu0
    %1506 = vxpose.xlu0.b32.start [1/16] %v1435, 128
    %1507 = vxpose.xlu0.b32.cont [2/16] %v1437, 128
    %1508 = vxpose.xlu0.b32.cont [3/16] %v1440, 128
    %1509 = vxpose.xlu0.b32.cont [4/16] %v1442, 128
    %1510 = vxpose.xlu0.b32.cont [5/16] %v1445, 128
    %1511 = vxpose.xlu0.b32.cont [6/16] %v1447, 128
    %1512 = vxpose.xlu0.b32.cont [7/16] %v1450, 128
    %1513 = vxpose.xlu0.b32.cont [8/16] %v1452, 128
    %1514 = vxpose.xlu0.b32.cont [9/16] %v1455, 128
    %1515 = vxpose.xlu0.b32.cont [10/16] %v1457, 128
    %1516 = vxpose.xlu0.b32.cont [11/16] %v1460, 128
    %1517 = vxpose.xlu0.b32.cont [12/16] %v1462, 128
    %1518 = vxpose.xlu0.b32.cont [13/16] %v1465, 128
    %1519 = vxpose.xlu0.b32.cont [14/16] %v1467, 128
    %1520 = vxpose.xlu0.b32.cont [15/16] %v1470, 128
    %1521 = vxpose.xlu0.b32.end [16/16] %v1472, 128
    %v1522 = vpop.trf.xlu0
    %v1523 = vpop.trf.xlu0
    %v1524 = vpop.trf.xlu0
    %v1525 = vpop.trf.xlu0
    %v1526 = vpop.trf.xlu0
    %v1527 = vpop.trf.xlu0
    %v1528 = vpop.trf.xlu0
    %v1529 = vpop.trf.xlu0
    %v1530 = vpop.trf.xlu0
    %v1531 = vpop.trf.xlu0
    %v1532 = vpop.trf.xlu0
    %v1533 = vpop.trf.xlu0
    %v1534 = vpop.trf.xlu0
    %v1535 = vpop.trf.xlu0
    %v1536 = vpop.trf.xlu0
    %v1537 = vpop.trf.xlu0
    %1538 = vst [vmem:[#allocation5] sm:$0xff] %v1490
    %1539 = vst [vmem:[#allocation5 + $0x8] sm:$0xff] %v1522
    // Predicated region
    $region34: #{tpu_custom_call.1} parent=1 // pred_check
      _
    $region35: #{tpu_custom_call.1} parent=1 // pred_check_branch
      %1541 = sbr.rel (0) target = $region37
    $region36: #{tpu_custom_call.1} parent=1 // pred_region
      %1543 = vsyncadd [#allocation4], 0
      %s1545 = sshll.u32 [#allocation5], 4
      %s1546 = int_to_ptr.vmem [resolvable:$true] %s1545
      %s1547 = sshll.u32 %s7, 4
      %s1548 = int_to_ptr.hbm [resolvable:$true] %s1547
      %1550 = dma.vmem_to_hbm [thread:$0]  %s1546, 256, %s1548, [#allocation4]
    $region37: #{tpu_custom_call.1} parent=1 // pred_fallthru
      _
    // Predicated region
    $region38: #{tpu_custom_call.1} parent=1 // pred_check
      _
    $region39: #{tpu_custom_call.1} parent=1 // pred_check_branch
      %1552 = sbr.rel (0) target = $region41
    $region40: #{tpu_custom_call.1} parent=1 // pred_region
      %1554 = dma.done [#allocation4], 256
    $region41: #{tpu_custom_call.1} parent=1 // pred_fallthru
      _
    %1555 = vsyncpa [#allocation3], 1
    %1556 = vsyncpa [#allocation4], 1

</llo_original>
